<compile_context>
chip_gen: v7x
topology: tpu7x:2x2x1
jax: 0.10.0
libtpu: 0.0.40
codegen_flags: <defaults>
</compile_context>

<pallas_src>
import functools

import jax
import jax.numpy as jnp
import numpy as np
from jax.experimental import pallas as pl
from jax.experimental.pallas import tpu as pltpu


def _silu(x):
    # exact SiLU; exp goes to the EUP.  (pl.reciprocal(approx=True) would move
    # the divide to the EUP too, but loosens accuracy below the 1e-4 check.)
    return x * (1.0 / (1.0 + jnp.exp(-x)))


# --------------------------------------------------------------------------- #
# Pallas kernel
# --------------------------------------------------------------------------- #
def _csp_kernel(x2_ref, x1_ref, su_ref, sd_ref, w1_ref, b1_ref, w2_ref,
                we1_ref, we2_ref, br_ref, bp1_ref, out_ref,
                *, NB, H, WC1, WC2, WMID, WCOUT):
    f32 = jnp.float32
    R = NB * H

    x2 = x2_ref[...].reshape(R, WC2)      # part2, rows = (image, y), lanes = x*C2 + c
    x1 = x1_ref[...].reshape(R, WC1)      # part1
    su = su_ref[...]                      # (R, R): row y pulls row y-1 (0 at top edge)
    sd = sd_ref[...]                      # (R, R): row y pulls row y+1 (0 at bottom edge)

    def mm(a, b):
        return jnp.dot(a, b, preferred_element_type=f32)

    def conv3(v, w_ref):
        # 3x3 'same' conv: W-axis taps + channel mixing live inside each lifted
        # (W*cin, W*cout) slab; H-axis taps are the three row-shifted matmuls.
        return mm(mm(su, v), w_ref[0]) + mm(v, w_ref[1]) + mm(mm(sd, v), w_ref[2])

    # residual branch: conv1 (+BN1 folded) -> SiLU -> conv2 (+BN2 folded)
    h = _silu(conv3(x2, w1_ref) + b1_ref[...])            # (R, W*MID)
    r = conv3(h, w2_ref)                                  # (R, W*COUT), part1 lanes are 0

    # 1x1 dim equalizers; lifted weights scatter outputs into the packed
    # x*COUT + c lane layout (residual lanes vs part1 lanes are disjoint).
    skip = mm(x2, we1_ref[...])                           # residual lanes only
    p1 = mm(x1, we2_ref[...])                             # part1 lanes only

    # SiLU(0) == 0, so the activation leaves the (zero) part1 lanes untouched;
    # adding p1 + its bias afterwards fills them in -> the channel concat is free.
    out = _silu(r + skip + br_ref[...]) + p1 + bp1_ref[...]
    out_ref[...] = out.reshape(NB, H, WCOUT).astype(out_ref.dtype)


# --------------------------------------------------------------------------- #
# Wrapper-side weight "lifting" (done once, in numpy)
# --------------------------------------------------------------------------- #
def _lift_conv3(w_hwio, W, cout_stride=None, cout_offset=0):
    """3x3 HWIO conv -> 3 slabs (kh, W*cin, W*cout_stride).  Zero columns give
    the W-boundary 'same' padding; cout_offset packs outputs at lane
    x*cout_stride + cout_offset + co."""
    w = np.asarray(w_hwio, np.float32)
    kh, kw, cin, cout = w.shape
    if cout_stride is None:
        cout_stride = cout
    slab = np.zeros((kh, W * cin, W * cout_stride), np.float32)
    for dy in range(kh):
        for dx in range(kw):
            for xo in range(W):
                xi = xo + dx - 1
                if 0 <= xi < W:
                    slab[dy, xi * cin:(xi + 1) * cin,
                         xo * cout_stride + cout_offset:
                         xo * cout_stride + cout_offset + cout] = w[dy, dx]
    return jnp.asarray(slab)


def _lift_conv1(w_io, W, cout_stride=None, cout_offset=0):
    w = np.asarray(w_io, np.float32)
    cin, cout = w.shape
    if cout_stride is None:
        cout_stride = cout
    slab = np.zeros((W * cin, W * cout_stride), np.float32)
    for xo in range(W):
        slab[xo * cin:(xo + 1) * cin,
             xo * cout_stride + cout_offset:
             xo * cout_stride + cout_offset + cout] = w
    return jnp.asarray(slab)


def _lift_bias(b, W, cout_stride=None, cout_offset=0):
    b = np.asarray(b, np.float32).reshape(-1)
    cout = b.shape[0]
    if cout_stride is None:
        cout_stride = cout
    slab = np.zeros((1, W * cout_stride), np.float32)
    for xo in range(W):
        slab[0, xo * cout_stride + cout_offset:
             xo * cout_stride + cout_offset + cout] = b
    return jnp.asarray(slab)


def _shift_mats(NB, H):
    """(R,R) 0/1 row-shift matrices; per-image boundaries give zero rows (the
    H-direction 'same' padding)."""
    R = NB * H
    su = np.zeros((R, R), np.float32)   # out row i <- in row i-1
    sd = np.zeros((R, R), np.float32)   # out row i <- in row i+1
    for n in range(NB):
        for y in range(H):
            i = n * H + y
            if y > 0:
                su[i, i - 1] = 1.0
            if y < H - 1:
                sd[i, i + 1] = 1.0
    return jnp.asarray(su), jnp.asarray(sd)


def lift_params(params, cfg, W):
    C1OUT, C2OUT = cfg["C1OUT"], cfg["C2OUT"]
    COUT = C1OUT + C2OUT
    b_r = (np.asarray(params["b2"], np.float32).reshape(-1) +
           np.asarray(params["be1"], np.float32).reshape(-1))
    return dict(
        w1=_lift_conv3(params["w1"], W),
        b1=_lift_bias(params["b1"], W),
        w2=_lift_conv3(params["w2"], W, cout_stride=COUT, cout_offset=C1OUT),
        we1=_lift_conv1(params["we1"], W, cout_stride=COUT, cout_offset=C1OUT),
        we2=_lift_conv1(params["we2"], W, cout_stride=COUT, cout_offset=0),
        br=_lift_bias(b_r, W, cout_stride=COUT, cout_offset=C1OUT),
        bp1=_lift_bias(params["be2"], W, cout_stride=COUT, cout_offset=0),
    )


# --------------------------------------------------------------------------- #
# Parameter init (BN folded, inference mode) + forward + reference
# --------------------------------------------------------------------------- #
def init_params(key, in_dim, mid_dim, out_dim, part_ratio=0.5, eps=1e-5):
    C1 = int(in_dim * part_ratio)
    C2 = in_dim - C1
    C1OUT = int(out_dim * part_ratio)
    C2OUT = out_dim - C1OUT
    ks = jax.random.split(key, 6)

    def bn_fold(c):
        gamma = 1.0 + 0.1 * jnp.arange(c, dtype=jnp.float32)
        beta = 0.05 * jnp.arange(c, dtype=jnp.float32) - 0.1
        mean = 0.02 * jnp.arange(c, dtype=jnp.float32)
        var = 1.0 + 0.03 * jnp.arange(c, dtype=jnp.float32)
        scale = gamma / jnp.sqrt(var + eps)
        shift = beta - mean * scale
        return scale, shift

    w1 = 0.2 * jax.random.normal(ks[0], (3, 3, C2, mid_dim), jnp.float32)
    s1, sh1 = bn_fold(mid_dim)
    w1f = w1 * s1[None, None, None, :]
    b1f = sh1.reshape(1, mid_dim)

    w2 = 0.2 * jax.random.normal(ks[1], (3, 3, mid_dim, C2OUT), jnp.float32)
    s2, sh2 = bn_fold(C2OUT)
    w2f = w2 * s2[None, None, None, :]
    b2f = sh2.reshape(1, C2OUT)

    if C1 != C1OUT:      # matches PyTorch: `elif self.part1_chnls != self.part1_out_chnls`
        we1 = 0.2 * jax.random.normal(ks[2], (C2, C2OUT), jnp.float32)
        be1 = 0.1 * jax.random.normal(ks[3], (1, C2OUT), jnp.float32)
        we2 = 0.2 * jax.random.normal(ks[4], (C1, C1OUT), jnp.float32)
        be2 = 0.1 * jax.random.normal(ks[5], (1, C1OUT), jnp.float32)
    else:                # PyTorch skips the equalizers -> identity 1x1 conv
        we1 = jnp.eye(C2, dtype=jnp.float32)
        be1 = jnp.zeros((1, C2OUT), jnp.float32)
        we2 = jnp.eye(C1, dtype=jnp.float32)
        be2 = jnp.zeros((1, C1OUT), jnp.float32)

    params = dict(w1=w1f, b1=b1f, w2=w2f, b2=b2f,
                  we1=we1, be1=be1, we2=we2, be2=be2)
    cfg = dict(C1=C1, C2=C2, MID=mid_dim, C1OUT=C1OUT, C2OUT=C2OUT)
    return params, cfg


def csp_forward(x_nchw, lifted, cfg, stride=1, max_block_n=8):
    assert stride == 1, "stride==2 projection path not implemented"
    C1, C2 = cfg["C1"], cfg["C2"]
    MID, C1OUT, C2OUT = cfg["MID"], cfg["C1OUT"], cfg["C2OUT"]
    COUT = C1OUT + C2OUT
    N, CIN, H, W = x_nchw.shape
    assert CIN == C1 + C2

    # batch several images per grid step (largest divisor of N up to max_block_n)
    NB = 1
    for cand in range(min(max_block_n, N), 0, -1):
        if N % cand == 0:
            NB = cand
            break
    R = NB * H
    WC1, WC2, WMID, WCOUT = W * C1, W * C2, W * MID, W * COUT

    x = jnp.transpose(x_nchw, (0, 2, 3, 1))          # NCHW -> NHWC
    x1 = x[..., :C1].reshape(N, H, WC1)              # lane index = x*C1 + c
    x2 = x[..., C1:].reshape(N, H, WC2)              # lane index = x*C2 + c

    su, sd = _shift_mats(NB, H)

    kernel = functools.partial(_csp_kernel, NB=NB, H=H, WC1=WC1, WC2=WC2,
                               WMID=WMID, WCOUT=WCOUT)

    out = pl.pallas_call(
        kernel,
        out_shape=jax.ShapeDtypeStruct((N, H, WCOUT), jnp.float32),
        grid_spec=pltpu.PrefetchScalarGridSpec(
            num_scalar_prefetch=0,
            grid=(N // NB,),
            in_specs=[
                pl.BlockSpec((NB, H, WC2), lambda n: (n, 0, 0)),
                pl.BlockSpec((NB, H, WC1), lambda n: (n, 0, 0)),
                pl.BlockSpec((R, R), lambda n: (0, 0)),
                pl.BlockSpec((R, R), lambda n: (0, 0)),
                pl.BlockSpec((3, WC2, WMID), lambda n: (0, 0, 0)),
                pl.BlockSpec((1, WMID), lambda n: (0, 0)),
                pl.BlockSpec((3, WMID, WCOUT), lambda n: (0, 0, 0)),
                pl.BlockSpec((WC2, WCOUT), lambda n: (0, 0)),
                pl.BlockSpec((WC1, WCOUT), lambda n: (0, 0)),
                pl.BlockSpec((1, WCOUT), lambda n: (0, 0)),
                pl.BlockSpec((1, WCOUT), lambda n: (0, 0)),
            ],
            out_specs=pl.BlockSpec((NB, H, WCOUT), lambda n: (n, 0, 0)),
        ),
        compiler_params=pltpu.CompilerParams(
            dimension_semantics=("parallel",)),
    )(x2, x1, su, sd, lifted["w1"], lifted["b1"], lifted["w2"],
      lifted["we1"], lifted["we2"], lifted["br"], lifted["bp1"])

    out = out.reshape(N, H, W, COUT)
    return jnp.transpose(out, (0, 3, 1, 2))          # NHWC -> NCHW


def reference_forward(x_nchw, params, cfg):
    """Plain-JAX reference (uses XLA convs) for correctness checking."""
    C1 = cfg["C1"]
    x = jnp.transpose(x_nchw, (0, 2, 3, 1))
    part1 = x[..., :C1]
    part2 = x[..., C1:]
    dn = ("NHWC", "HWIO", "NHWC")
    conv = lambda a, w: jax.lax.conv_general_dilated(
        a, w, (1, 1), "SAME", dimension_numbers=dn)
    h = conv(part2, params["w1"]) + params["b1"].reshape(1, 1, 1, -1)
    h = _silu(h)
    r = conv(h, params["w2"]) + params["b2"].reshape(1, 1, 1, -1)
    skip = jnp.einsum("nhwc,cd->nhwd", part2, params["we1"]) + params["be1"].reshape(1, 1, 1, -1)
    p1 = jnp.einsum("nhwc,cd->nhwd", part1, params["we2"]) + params["be2"].reshape(1, 1, 1, -1)
    r = _silu(r + skip)
    out = jnp.concatenate([p1, r], axis=-1)
    return jnp.transpose(out, (0, 3, 1, 2))


if __name__ == "__main__":
    N, IN_DIM, MID_DIM, OUT_DIM, H, W = 2, 4, 8, 8, 16, 16

    key = jax.random.PRNGKey(0)
    kx, kp = jax.random.split(key)
    x = jax.random.normal(kx, (N, IN_DIM, H, W), jnp.float32)   # NCHW like PyTorch

    params, cfg = init_params(kp, IN_DIM, MID_DIM, OUT_DIM)
    lifted = lift_params(params, cfg, W)

    out = csp_forward(x, lifted, cfg)
    out = jax.block_until_ready(out)

    ref = reference_forward(x, params, cfg)
    assert out.shape == (N, OUT_DIM, H, W), out.shape
    max_err = jnp.max(jnp.abs(out - ref))
    assert jnp.allclose(out, ref, atol=1e-4, rtol=1e-4), f"max err {max_err}"

    print("KERNEL_OK")
</pallas_src>

<mosaic_0001>
module attributes {stable_mosaic.version = 11 : i64} {
  func.func @_csp_kernel(%arg0: i32, %arg1: memref<2x16x32xf32, #tpu.memory_space<vmem>>, %arg2: memref<2x16x32xf32, #tpu.memory_space<vmem>>, %arg3: memref<32x32xf32, #tpu.memory_space<vmem>>, %arg4: memref<32x32xf32, #tpu.memory_space<vmem>>, %arg5: memref<3x32x128xf32, #tpu.memory_space<vmem>>, %arg6: memref<1x128xf32, #tpu.memory_space<vmem>>, %arg7: memref<3x128x128xf32, #tpu.memory_space<vmem>>, %arg8: memref<32x128xf32, #tpu.memory_space<vmem>>, %arg9: memref<32x128xf32, #tpu.memory_space<vmem>>, %arg10: memref<1x128xf32, #tpu.memory_space<vmem>>, %arg11: memref<1x128xf32, #tpu.memory_space<vmem>>, %arg12: memref<2x16x128xf32, #tpu.memory_space<vmem>>) attributes {dimension_semantics = [#tpu.dimension_semantics<parallel>], iteration_bounds = array<i64: 1>, scalar_prefetch = 0 : i64, scratch_operands = 0 : i64, tpu.core_type = #tpu.core_type<tc>, window_params = [{transform_indices = @transform_0, window_bounds = array<i64: 2, 16, 32>}, {transform_indices = @transform_1, window_bounds = array<i64: 2, 16, 32>}, {pipeline_mode = #tpu.pipeline_mode<synchronous>, transform_indices = @transform_2, window_bounds = array<i64: 32, 32>}, {pipeline_mode = #tpu.pipeline_mode<synchronous>, transform_indices = @transform_3, window_bounds = array<i64: 32, 32>}, {pipeline_mode = #tpu.pipeline_mode<synchronous>, transform_indices = @transform_4, window_bounds = array<i64: 3, 32, 128>}, {pipeline_mode = #tpu.pipeline_mode<synchronous>, transform_indices = @transform_5, window_bounds = array<i64: 1, 128>}, {pipeline_mode = #tpu.pipeline_mode<synchronous>, transform_indices = @transform_6, window_bounds = array<i64: 3, 128, 128>}, {pipeline_mode = #tpu.pipeline_mode<synchronous>, transform_indices = @transform_7, window_bounds = array<i64: 32, 128>}, {pipeline_mode = #tpu.pipeline_mode<synchronous>, transform_indices = @transform_8, window_bounds = array<i64: 32, 128>}, {pipeline_mode = #tpu.pipeline_mode<synchronous>, transform_indices = @transform_9, window_bounds = array<i64: 1, 128>}, {pipeline_mode = #tpu.pipeline_mode<synchronous>, transform_indices = @transform_10, window_bounds = array<i64: 1, 128>}, {transform_indices = @transform_11, window_bounds = array<i64: 2, 16, 128>}]} {
    %c0 = arith.constant 0 : index
    %c0_0 = arith.constant 0 : index
    %c0_1 = arith.constant 0 : index
    %0 = vector.load %arg1[%c0, %c0_0, %c0_1] : memref<2x16x32xf32, #tpu.memory_space<vmem>>, vector<2x16x32xf32>
    %1 = vector.shape_cast %0 : vector<2x16x32xf32> to vector<32x32xf32>
    %c0_2 = arith.constant 0 : index
    %c0_3 = arith.constant 0 : index
    %c0_4 = arith.constant 0 : index
    %2 = vector.load %arg2[%c0_2, %c0_3, %c0_4] : memref<2x16x32xf32, #tpu.memory_space<vmem>>, vector<2x16x32xf32>
    %3 = vector.shape_cast %2 : vector<2x16x32xf32> to vector<32x32xf32>
    %c0_5 = arith.constant 0 : index
    %c0_6 = arith.constant 0 : index
    %4 = vector.load %arg3[%c0_5, %c0_6] : memref<32x32xf32, #tpu.memory_space<vmem>>, vector<32x32xf32>
    %c0_7 = arith.constant 0 : index
    %c0_8 = arith.constant 0 : index
    %5 = vector.load %arg4[%c0_7, %c0_8] : memref<32x32xf32, #tpu.memory_space<vmem>>, vector<32x32xf32>
    %cst = arith.constant dense<0.000000e+00> : vector<32x32xf32>
    %6 = tpu.matmul %4, %1, %cst {dimension_numbers = #tpu.dot_dimension_numbers<[1], [0], [0], [1], [0, 0, 1, 1], [], []>} : vector<32x32xf32>, vector<32x32xf32>, vector<32x32xf32> -> vector<32x32xf32>
    %c0_9 = arith.constant 0 : index
    %c0_10 = arith.constant 0 : index
    %c0_11 = arith.constant 0 : index
    %7 = vector.load %arg5[%c0_9, %c0_10, %c0_11] : memref<3x32x128xf32, #tpu.memory_space<vmem>>, vector<1x32x128xf32>
    %8 = vector.shape_cast %7 : vector<1x32x128xf32> to vector<32x128xf32>
    %cst_12 = arith.constant dense<0.000000e+00> : vector<32x128xf32>
    %9 = tpu.matmul %6, %8, %cst_12 {dimension_numbers = #tpu.dot_dimension_numbers<[1], [0], [0], [1], [0, 0, 1, 1], [], []>} : vector<32x32xf32>, vector<32x128xf32>, vector<32x128xf32> -> vector<32x128xf32>
    %c1 = arith.constant 1 : index
    %c0_13 = arith.constant 0 : index
    %c0_14 = arith.constant 0 : index
    %10 = vector.load %arg5[%c1, %c0_13, %c0_14] : memref<3x32x128xf32, #tpu.memory_space<vmem>>, vector<1x32x128xf32>
    %11 = vector.shape_cast %10 : vector<1x32x128xf32> to vector<32x128xf32>
    %cst_15 = arith.constant dense<0.000000e+00> : vector<32x128xf32>
    %12 = tpu.matmul %1, %11, %cst_15 {dimension_numbers = #tpu.dot_dimension_numbers<[1], [0], [0], [1], [0, 0, 1, 1], [], []>} : vector<32x32xf32>, vector<32x128xf32>, vector<32x128xf32> -> vector<32x128xf32>
    %13 = arith.addf %9, %12 : vector<32x128xf32>
    %cst_16 = arith.constant dense<0.000000e+00> : vector<32x32xf32>
    %14 = tpu.matmul %5, %1, %cst_16 {dimension_numbers = #tpu.dot_dimension_numbers<[1], [0], [0], [1], [0, 0, 1, 1], [], []>} : vector<32x32xf32>, vector<32x32xf32>, vector<32x32xf32> -> vector<32x32xf32>
    %c2 = arith.constant 2 : index
    %c0_17 = arith.constant 0 : index
    %c0_18 = arith.constant 0 : index
    %15 = vector.load %arg5[%c2, %c0_17, %c0_18] : memref<3x32x128xf32, #tpu.memory_space<vmem>>, vector<1x32x128xf32>
    %16 = vector.shape_cast %15 : vector<1x32x128xf32> to vector<32x128xf32>
    %cst_19 = arith.constant dense<0.000000e+00> : vector<32x128xf32>
    %17 = tpu.matmul %14, %16, %cst_19 {dimension_numbers = #tpu.dot_dimension_numbers<[1], [0], [0], [1], [0, 0, 1, 1], [], []>} : vector<32x32xf32>, vector<32x128xf32>, vector<32x128xf32> -> vector<32x128xf32>
    %18 = arith.addf %13, %17 : vector<32x128xf32>
    %c0_20 = arith.constant 0 : index
    %c0_21 = arith.constant 0 : index
    %19 = vector.load %arg6[%c0_20, %c0_21] : memref<1x128xf32, #tpu.memory_space<vmem>>, vector<1x128xf32>
    %20 = vector.broadcast %19 : vector<1x128xf32> to vector<32x128xf32>
    %21 = arith.addf %18, %20 : vector<32x128xf32>
    %cst_22 = arith.constant 0.000000e+00 : f32
    %22 = vector.broadcast %cst_22 : f32 to vector<32x128xf32>
    %23 = arith.subf %22, %21 : vector<32x128xf32>
    %24 = math.exp %23 : vector<32x128xf32>
    %cst_23 = arith.constant 1.000000e+00 : f32
    %25 = vector.broadcast %cst_23 : f32 to vector<32x128xf32>
    %26 = arith.addf %25, %24 : vector<32x128xf32>
    %cst_24 = arith.constant 1.000000e+00 : f32
    %27 = vector.broadcast %cst_24 : f32 to vector<32x128xf32>
    %28 = arith.divf %27, %26 : vector<32x128xf32>
    %29 = arith.mulf %21, %28 : vector<32x128xf32>
    %cst_25 = arith.constant dense<0.000000e+00> : vector<32x128xf32>
    %30 = tpu.matmul %4, %29, %cst_25 {dimension_numbers = #tpu.dot_dimension_numbers<[1], [0], [0], [1], [0, 0, 1, 1], [], []>} : vector<32x32xf32>, vector<32x128xf32>, vector<32x128xf32> -> vector<32x128xf32>
    %c0_26 = arith.constant 0 : index
    %c0_27 = arith.constant 0 : index
    %c0_28 = arith.constant 0 : index
    %31 = vector.load %arg7[%c0_26, %c0_27, %c0_28] : memref<3x128x128xf32, #tpu.memory_space<vmem>>, vector<1x128x128xf32>
    %32 = vector.shape_cast %31 : vector<1x128x128xf32> to vector<128x128xf32>
    %cst_29 = arith.constant dense<0.000000e+00> : vector<32x128xf32>
    %33 = tpu.matmul %30, %32, %cst_29 {dimension_numbers = #tpu.dot_dimension_numbers<[1], [0], [0], [1], [0, 0, 1, 1], [], []>} : vector<32x128xf32>, vector<128x128xf32>, vector<32x128xf32> -> vector<32x128xf32>
    %c1_30 = arith.constant 1 : index
    %c0_31 = arith.constant 0 : index
    %c0_32 = arith.constant 0 : index
    %34 = vector.load %arg7[%c1_30, %c0_31, %c0_32] : memref<3x128x128xf32, #tpu.memory_space<vmem>>, vector<1x128x128xf32>
    %35 = vector.shape_cast %34 : vector<1x128x128xf32> to vector<128x128xf32>
    %cst_33 = arith.constant dense<0.000000e+00> : vector<32x128xf32>
    %36 = tpu.matmul %29, %35, %cst_33 {dimension_numbers = #tpu.dot_dimension_numbers<[1], [0], [0], [1], [0, 0, 1, 1], [], []>} : vector<32x128xf32>, vector<128x128xf32>, vector<32x128xf32> -> vector<32x128xf32>
    %37 = arith.addf %33, %36 : vector<32x128xf32>
    %cst_34 = arith.constant dense<0.000000e+00> : vector<32x128xf32>
    %38 = tpu.matmul %5, %29, %cst_34 {dimension_numbers = #tpu.dot_dimension_numbers<[1], [0], [0], [1], [0, 0, 1, 1], [], []>} : vector<32x32xf32>, vector<32x128xf32>, vector<32x128xf32> -> vector<32x128xf32>
    %c2_35 = arith.constant 2 : index
    %c0_36 = arith.constant 0 : index
    %c0_37 = arith.constant 0 : index
    %39 = vector.load %arg7[%c2_35, %c0_36, %c0_37] : memref<3x128x128xf32, #tpu.memory_space<vmem>>, vector<1x128x128xf32>
    %40 = vector.shape_cast %39 : vector<1x128x128xf32> to vector<128x128xf32>
    %cst_38 = arith.constant dense<0.000000e+00> : vector<32x128xf32>
    %41 = tpu.matmul %38, %40, %cst_38 {dimension_numbers = #tpu.dot_dimension_numbers<[1], [0], [0], [1], [0, 0, 1, 1], [], []>} : vector<32x128xf32>, vector<128x128xf32>, vector<32x128xf32> -> vector<32x128xf32>
    %42 = arith.addf %37, %41 : vector<32x128xf32>
    %c0_39 = arith.constant 0 : index
    %c0_40 = arith.constant 0 : index
    %43 = vector.load %arg8[%c0_39, %c0_40] : memref<32x128xf32, #tpu.memory_space<vmem>>, vector<32x128xf32>
    %cst_41 = arith.constant dense<0.000000e+00> : vector<32x128xf32>
    %44 = tpu.matmul %1, %43, %cst_41 {dimension_numbers = #tpu.dot_dimension_numbers<[1], [0], [0], [1], [0, 0, 1, 1], [], []>} : vector<32x32xf32>, vector<32x128xf32>, vector<32x128xf32> -> vector<32x128xf32>
    %c0_42 = arith.constant 0 : index
    %c0_43 = arith.constant 0 : index
    %45 = vector.load %arg9[%c0_42, %c0_43] : memref<32x128xf32, #tpu.memory_space<vmem>>, vector<32x128xf32>
    %cst_44 = arith.constant dense<0.000000e+00> : vector<32x128xf32>
    %46 = tpu.matmul %3, %45, %cst_44 {dimension_numbers = #tpu.dot_dimension_numbers<[1], [0], [0], [1], [0, 0, 1, 1], [], []>} : vector<32x32xf32>, vector<32x128xf32>, vector<32x128xf32> -> vector<32x128xf32>
    %47 = arith.addf %42, %44 : vector<32x128xf32>
    %c0_45 = arith.constant 0 : index
    %c0_46 = arith.constant 0 : index
    %48 = vector.load %arg10[%c0_45, %c0_46] : memref<1x128xf32, #tpu.memory_space<vmem>>, vector<1x128xf32>
    %49 = vector.broadcast %48 : vector<1x128xf32> to vector<32x128xf32>
    %50 = arith.addf %47, %49 : vector<32x128xf32>
    %cst_47 = arith.constant 0.000000e+00 : f32
    %51 = vector.broadcast %cst_47 : f32 to vector<32x128xf32>
    %52 = arith.subf %51, %50 : vector<32x128xf32>
    %53 = math.exp %52 : vector<32x128xf32>
    %cst_48 = arith.constant 1.000000e+00 : f32
    %54 = vector.broadcast %cst_48 : f32 to vector<32x128xf32>
    %55 = arith.addf %54, %53 : vector<32x128xf32>
    %cst_49 = arith.constant 1.000000e+00 : f32
    %56 = vector.broadcast %cst_49 : f32 to vector<32x128xf32>
    %57 = arith.divf %56, %55 : vector<32x128xf32>
    %58 = arith.mulf %50, %57 : vector<32x128xf32>
    %59 = arith.addf %58, %46 : vector<32x128xf32>
    %c0_50 = arith.constant 0 : index
    %c0_51 = arith.constant 0 : index
    %60 = vector.load %arg11[%c0_50, %c0_51] : memref<1x128xf32, #tpu.memory_space<vmem>>, vector<1x128xf32>
    %61 = vector.broadcast %60 : vector<1x128xf32> to vector<32x128xf32>
    %62 = arith.addf %59, %61 : vector<32x128xf32>
    %63 = vector.shape_cast %62 : vector<32x128xf32> to vector<2x16x128xf32>
    %c0_52 = arith.constant 0 : index
    %c0_53 = arith.constant 0 : index
    %c0_54 = arith.constant 0 : index
    %64 = vector.load %arg12[%c0_52, %c0_53, %c0_54] : memref<2x16x128xf32, #tpu.memory_space<vmem>>, vector<2x16x128xf32>
    tpu.vector_store %arg12[%c0_52, %c0_53, %c0_54], %63 {strides = array<i32>} : memref<2x16x128xf32, #tpu.memory_space<vmem>>, vector<2x16x128xf32>,
    return
  }
  func.func @transform_0(%arg0: i32) -> (i32, i32, i32) {
    %c0_i32 = arith.constant 0 : i32
    %c0_i32_0 = arith.constant 0 : i32
    %c0_i32_1 = arith.constant 0 : i32
    return %arg0, %c0_i32, %c0_i32_0 : i32, i32, i32
  }
  func.func @transform_1(%arg0: i32) -> (i32, i32, i32) {
    %c0_i32 = arith.constant 0 : i32
    %c0_i32_0 = arith.constant 0 : i32
    %c0_i32_1 = arith.constant 0 : i32
    return %arg0, %c0_i32, %c0_i32_0 : i32, i32, i32
  }
  func.func @transform_2(%arg0: i32) -> (i32, i32) {
    %c0_i32 = arith.constant 0 : i32
    %c0_i32_0 = arith.constant 0 : i32
    %c0_i32_1 = arith.constant 0 : i32
    return %c0_i32, %c0_i32_0 : i32, i32
  }
  func.func @transform_3(%arg0: i32) -> (i32, i32) {
    %c0_i32 = arith.constant 0 : i32
    %c0_i32_0 = arith.constant 0 : i32
    %c0_i32_1 = arith.constant 0 : i32
    return %c0_i32, %c0_i32_0 : i32, i32
  }
  func.func @transform_4(%arg0: i32) -> (i32, i32, i32) {
    %c0_i32 = arith.constant 0 : i32
    %c0_i32_0 = arith.constant 0 : i32
    %c0_i32_1 = arith.constant 0 : i32
    %c0_i32_2 = arith.constant 0 : i32
    return %c0_i32, %c0_i32_0, %c0_i32_1 : i32, i32, i32
  }
  func.func @transform_5(%arg0: i32) -> (i32, i32) {
    %c0_i32 = arith.constant 0 : i32
    %c0_i32_0 = arith.constant 0 : i32
    %c0_i32_1 = arith.constant 0 : i32
    return %c0_i32, %c0_i32_0 : i32, i32
  }
  func.func @transform_6(%arg0: i32) -> (i32, i32, i32) {
    %c0_i32 = arith.constant 0 : i32
    %c0_i32_0 = arith.constant 0 : i32
    %c0_i32_1 = arith.constant 0 : i32
    %c0_i32_2 = arith.constant 0 : i32
    return %c0_i32, %c0_i32_0, %c0_i32_1 : i32, i32, i32
  }
  func.func @transform_7(%arg0: i32) -> (i32, i32) {
    %c0_i32 = arith.constant 0 : i32
    %c0_i32_0 = arith.constant 0 : i32
    %c0_i32_1 = arith.constant 0 : i32
    return %c0_i32, %c0_i32_0 : i32, i32
  }
  func.func @transform_8(%arg0: i32) -> (i32, i32) {
    %c0_i32 = arith.constant 0 : i32
    %c0_i32_0 = arith.constant 0 : i32
    %c0_i32_1 = arith.constant 0 : i32
    return %c0_i32, %c0_i32_0 : i32, i32
  }
  func.func @transform_9(%arg0: i32) -> (i32, i32) {
    %c0_i32 = arith.constant 0 : i32
    %c0_i32_0 = arith.constant 0 : i32
    %c0_i32_1 = arith.constant 0 : i32
    return %c0_i32, %c0_i32_0 : i32, i32
  }
  func.func @transform_10(%arg0: i32) -> (i32, i32) {
    %c0_i32 = arith.constant 0 : i32
    %c0_i32_0 = arith.constant 0 : i32
    %c0_i32_1 = arith.constant 0 : i32
    return %c0_i32, %c0_i32_0 : i32, i32
  }
  func.func @transform_11(%arg0: i32) -> (i32, i32, i32) {
    %c0_i32 = arith.constant 0 : i32
    %c0_i32_0 = arith.constant 0 : i32
    %c0_i32_1 = arith.constant 0 : i32
    return %arg0, %c0_i32, %c0_i32_0 : i32, i32, i32
  }
}

</mosaic_0001>

<llo_original>
// kernel: tpu_custom_call.1
$region0: #{tpu_custom_call.1}
  #allocation0 [shape = 'u32[]', space=smem, size = 0x4, offset = 0x4, fixed_abs, tag = 'smem constant byte address 0x4 - core index']
  #allocation1 [shape = 'u32[144,128]{1,0:T(1,128)}', space=vmem, size = 0x12000, scoped, tag = 'internal scratch']
  %s0 = inlined_call_operand.hbm [shape: f32[2,16,32], index: 0, kind: input, shape index: {}]
  %s1 = inlined_call_operand.hbm [shape: f32[2,16,32], index: 1, kind: input, shape index: {}]
  %s2 = inlined_call_operand.hbm [shape: f32[32,32], index: 2, kind: input, shape index: {}]
  %s3 = inlined_call_operand.hbm [shape: f32[32,32], index: 3, kind: input, shape index: {}]
  %s4 = inlined_call_operand.hbm [shape: f32[3,32,128], index: 4, kind: input, shape index: {}]
  %s5 = inlined_call_operand.vmem [shape: f32[1,128], index: 5, kind: input, shape index: {}]
  %s6 = inlined_call_operand.hbm [shape: f32[3,128,128], index: 6, kind: input, shape index: {}]
  %s7 = inlined_call_operand.hbm [shape: f32[32,128], index: 7, kind: input, shape index: {}]
  %s8 = inlined_call_operand.hbm [shape: f32[32,128], index: 8, kind: input, shape index: {}]
  %s9 = inlined_call_operand.vmem [shape: f32[1,128], index: 9, kind: input, shape index: {}]
  %s10 = inlined_call_operand.vmem [shape: f32[1,128], index: 10, kind: input, shape index: {}]
  %s11 = inlined_call_operand.hbm [shape: f32[2,16,128], index: 11, kind: output, shape index: {}]
  %s12 = sld [smem:[#allocation0]]
  $region86: #{tpu_custom_call.1} parent=0
    _
  %s14 = ssub.s32 1, %s12
  %s15 = scalar_select 0, %s14, %s12
  $region1: #{tpu_custom_call.1} parent=0
    #allocation2 [shape = 'u8[16384]{0}', space=vmem, size = 0x4000, scoped, tag = 'input window, operand 0, single buffered']
    #allocation3 [shape = 's32[1]{0}', space=sflag, size = 0x4, scoped, tag = 'scoped memory for tpu_custom_call.1']
    #allocation4 [shape = 's32[1]{0}', space=sflag, size = 0x4, scoped, tag = 'scoped memory for tpu_custom_call.1']
    #allocation5 [shape = 'u8[16384]{0}', space=vmem, size = 0x4000, scoped, tag = 'input window, operand 1, single buffered']
    #allocation6 [shape = 's32[1]{0}', space=sflag, size = 0x4, scoped, tag = 'scoped memory for tpu_custom_call.1']
    #allocation7 [shape = 'u8[16384]{0}', space=vmem, size = 0x4000, scoped, tag = 'input window, operand 2, single buffered']
    #allocation8 [shape = 'u8[16384]{0}', space=vmem, size = 0x4000, scoped, tag = 'input window, operand 3, single buffered']
    #allocation9 [shape = 's32[1]{0}', space=sflag, size = 0x4, scoped, tag = 'scoped memory for tpu_custom_call.1']
    #allocation10 [shape = 'u8[49152]{0}', space=vmem, size = 0xc000, scoped, tag = 'input window, operand 4, single buffered']
    #allocation11 [shape = 'u8[196608]{0}', space=vmem, size = 0x30000, scoped, tag = 'input window, operand 6, single buffered']
    #allocation12 [shape = 's32[1]{0}', space=sflag, size = 0x4, scoped, tag = 'scoped memory for tpu_custom_call.1']
    #allocation13 [shape = 'u8[16384]{0}', space=vmem, size = 0x4000, scoped, tag = 'input window, operand 7, single buffered']
    #allocation14 [shape = 'u8[16384]{0}', space=vmem, size = 0x4000, scoped, tag = 'input window, operand 8, single buffered']
    #allocation15 [shape = 's32[1]{0}', space=sflag, size = 0x4, scoped, tag = 'scoped memory for tpu_custom_call.1']
    #allocation16 [shape = 'u8[16384]{0}', space=vmem, size = 0x4000, scoped, tag = 'output window, operand 0, single buffered']
    %16 = vsyncpa [#allocation3], 0
    %17 = vsyncpa [#allocation6], 0
    %18 = vsyncpa [#allocation9], 0
    %19 = vsyncpa [#allocation12], 0
    %20 = vsyncpa [#allocation15], 0
    %21 = vsyncpa [#allocation4], 0
    // Predicated region
    $region2: #{tpu_custom_call.1} parent=1 // pred_check
      _
    $region3: #{tpu_custom_call.1} parent=1 // pred_check_branch
      %23 = sbr.rel (0) target = $region5
    $region4: #{tpu_custom_call.1} parent=1 // pred_region
      %s25 = ssub.s32 512, 512
      %26 = vsyncadd [#allocation3], %s25
      %s27 = sshll.u32 [#allocation2], 4
      %s28 = int_to_ptr.vmem [resolvable:$true] %s27
      %33 = dma.hbm_to_vmem [thread:$0]  %s0, 512, %s28, [#allocation3], 128, 128, 8
    $region5: #{tpu_custom_call.1} parent=1 // pred_fallthru
      _
    // Predicated region
    $region6: #{tpu_custom_call.1} parent=1 // pred_check
      _
    $region7: #{tpu_custom_call.1} parent=1 // pred_check_branch
      %35 = sbr.rel (0) target = $region9
    $region8: #{tpu_custom_call.1} parent=1 // pred_region
      %s37 = ssub.s32 512, 512
      %38 = vsyncadd [#allocation6], %s37
      %s39 = sshll.u32 [#allocation5], 4
      %s40 = int_to_ptr.vmem [resolvable:$true] %s39
      %45 = dma.hbm_to_vmem [thread:$0]  %s1, 512, %s40, [#allocation6], 128, 128, 8
    $region9: #{tpu_custom_call.1} parent=1 // pred_fallthru
      _
    // Predicated region
    $region10: #{tpu_custom_call.1} parent=1 // pred_check
      _
    $region11: #{tpu_custom_call.1} parent=1 // pred_check_branch
      %47 = sbr.rel (0) target = $region13
    $region12: #{tpu_custom_call.1} parent=1 // pred_region
      %s49 = ssub.s32 512, 512
      %50 = vsyncadd [#allocation6], %s49
      %s51 = sshll.u32 [#allocation7], 4
      %s52 = int_to_ptr.vmem [resolvable:$true] %s51
      %57 = dma.hbm_to_vmem [thread:$0]  %s2, 512, %s52, [#allocation6], 128, 128, 8
    $region13: #{tpu_custom_call.1} parent=1 // pred_fallthru
      _
    // Predicated region
    $region14: #{tpu_custom_call.1} parent=1 // pred_check
      _
    $region15: #{tpu_custom_call.1} parent=1 // pred_check_branch
      %59 = sbr.rel (0) target = $region17
    $region16: #{tpu_custom_call.1} parent=1 // pred_region
      %s61 = ssub.s32 512, 512
      %62 = vsyncadd [#allocation9], %s61
      %s63 = sshll.u32 [#allocation8], 4
      %s64 = int_to_ptr.vmem [resolvable:$true] %s63
      %69 = dma.hbm_to_vmem [thread:$0]  %s3, 512, %s64, [#allocation9], 128, 128, 8
    $region17: #{tpu_custom_call.1} parent=1 // pred_fallthru
      _
    // Predicated region
    $region18: #{tpu_custom_call.1} parent=1 // pred_check
      _
    $region19: #{tpu_custom_call.1} parent=1 // pred_check_branch
      %71 = sbr.rel (0) target = $region21
    $region20: #{tpu_custom_call.1} parent=1 // pred_region
      %s73 = ssub.s32 1536, 1536
      %74 = vsyncadd [#allocation9], %s73
      %s75 = sshll.u32 [#allocation10], 4
      %s76 = int_to_ptr.vmem [resolvable:$true] %s75
      %81 = dma.hbm_to_vmem [thread:$0]  %s4, 1536, %s76, [#allocation9], 128, 128, 8
    $region21: #{tpu_custom_call.1} parent=1 // pred_fallthru
      _
    // Predicated region
    $region22: #{tpu_custom_call.1} parent=1 // pred_check
      _
    $region23: #{tpu_custom_call.1} parent=1 // pred_check_branch
      %83 = sbr.rel (0) target = $region25
    $region24: #{tpu_custom_call.1} parent=1 // pred_region
      _
    $region25: #{tpu_custom_call.1} parent=1 // pred_fallthru
      _
    // Predicated region
    $region26: #{tpu_custom_call.1} parent=1 // pred_check
      _
    $region27: #{tpu_custom_call.1} parent=1 // pred_check_branch
      %85 = sbr.rel (0) target = $region29
    $region28: #{tpu_custom_call.1} parent=1 // pred_region
      %s87 = ssub.s32 6144, 6144
      %88 = vsyncadd [#allocation12], %s87
      %s89 = sshll.u32 [#allocation11], 4
      %s90 = int_to_ptr.vmem [resolvable:$true] %s89
      %95 = dma.hbm_to_vmem [thread:$0]  %s6, 6144, %s90, [#allocation12], 128, 128, 8
    $region29: #{tpu_custom_call.1} parent=1 // pred_fallthru
      _
    // Predicated region
    $region30: #{tpu_custom_call.1} parent=1 // pred_check
      _
    $region31: #{tpu_custom_call.1} parent=1 // pred_check_branch
      %97 = sbr.rel (0) target = $region33
    $region32: #{tpu_custom_call.1} parent=1 // pred_region
      %s99 = ssub.s32 512, 512
      %100 = vsyncadd [#allocation12], %s99
      %s101 = sshll.u32 [#allocation13], 4
      %s102 = int_to_ptr.vmem [resolvable:$true] %s101
      %107 = dma.hbm_to_vmem [thread:$0]  %s7, 512, %s102, [#allocation12], 128, 128, 8
    $region33: #{tpu_custom_call.1} parent=1 // pred_fallthru
      _
    // Predicated region
    $region34: #{tpu_custom_call.1} parent=1 // pred_check
      _
    $region35: #{tpu_custom_call.1} parent=1 // pred_check_branch
      %109 = sbr.rel (0) target = $region37
    $region36: #{tpu_custom_call.1} parent=1 // pred_region
      %s111 = ssub.s32 512, 512
      %112 = vsyncadd [#allocation15], %s111
      %s113 = sshll.u32 [#allocation14], 4
      %s114 = int_to_ptr.vmem [resolvable:$true] %s113
      %119 = dma.hbm_to_vmem [thread:$0]  %s8, 512, %s114, [#allocation15], 128, 128, 8
    $region37: #{tpu_custom_call.1} parent=1 // pred_fallthru
      _
    // Predicated region
    $region38: #{tpu_custom_call.1} parent=1 // pred_check
      _
    $region39: #{tpu_custom_call.1} parent=1 // pred_check_branch
      %121 = sbr.rel (0) target = $region41
    $region40: #{tpu_custom_call.1} parent=1 // pred_region
      _
    $region41: #{tpu_custom_call.1} parent=1 // pred_fallthru
      _
    // Predicated region
    $region42: #{tpu_custom_call.1} parent=1 // pred_check
      _
    $region43: #{tpu_custom_call.1} parent=1 // pred_check_branch
      %123 = sbr.rel (0) target = $region45
    $region44: #{tpu_custom_call.1} parent=1 // pred_region
      _
    $region45: #{tpu_custom_call.1} parent=1 // pred_fallthru
      _
    // Predicated region
    $region46: #{tpu_custom_call.1} parent=1 // pred_check
      _
    $region47: #{tpu_custom_call.1} parent=1 // pred_check_branch
      %125 = sbr.rel (0) target = $region49
    $region48: #{tpu_custom_call.1} parent=1 // pred_region
      %126 = dma.done [#allocation3], 512
    $region49: #{tpu_custom_call.1} parent=1 // pred_fallthru
      _
    // Predicated region
    $region50: #{tpu_custom_call.1} parent=1 // pred_check
      _
    $region51: #{tpu_custom_call.1} parent=1 // pred_check_branch
      %128 = sbr.rel (0) target = $region53
    $region52: #{tpu_custom_call.1} parent=1 // pred_region
      %129 = dma.done [#allocation6], 512
    $region53: #{tpu_custom_call.1} parent=1 // pred_fallthru
      _
    // Predicated region
    $region54: #{tpu_custom_call.1} parent=1 // pred_check
      _
    $region55: #{tpu_custom_call.1} parent=1 // pred_check_branch
      %131 = sbr.rel (0) target = $region57
    $region56: #{tpu_custom_call.1} parent=1 // pred_region
      %132 = dma.done [#allocation6], 512
    $region57: #{tpu_custom_call.1} parent=1 // pred_fallthru
      _
    // Predicated region
    $region58: #{tpu_custom_call.1} parent=1 // pred_check
      _
    $region59: #{tpu_custom_call.1} parent=1 // pred_check_branch
      %134 = sbr.rel (0) target = $region61
    $region60: #{tpu_custom_call.1} parent=1 // pred_region
      %135 = dma.done [#allocation9], 512
    $region61: #{tpu_custom_call.1} parent=1 // pred_fallthru
      _
    // Predicated region
    $region62: #{tpu_custom_call.1} parent=1 // pred_check
      _
    $region63: #{tpu_custom_call.1} parent=1 // pred_check_branch
      %137 = sbr.rel (0) target = $region65
    $region64: #{tpu_custom_call.1} parent=1 // pred_region
      %138 = dma.done [#allocation9], 1536
    $region65: #{tpu_custom_call.1} parent=1 // pred_fallthru
      _
    // Predicated region
    $region66: #{tpu_custom_call.1} parent=1 // pred_check
      _
    $region67: #{tpu_custom_call.1} parent=1 // pred_check_branch
      %140 = sbr.rel (0) target = $region69
    $region68: #{tpu_custom_call.1} parent=1 // pred_region
      %141 = dma.done [#allocation12], 6144
    $region69: #{tpu_custom_call.1} parent=1 // pred_fallthru
      _
    // Predicated region
    $region70: #{tpu_custom_call.1} parent=1 // pred_check
      _
    $region71: #{tpu_custom_call.1} parent=1 // pred_check_branch
      %143 = sbr.rel (0) target = $region73
    $region72: #{tpu_custom_call.1} parent=1 // pred_region
      %144 = dma.done [#allocation12], 512
    $region73: #{tpu_custom_call.1} parent=1 // pred_fallthru
      _
    // Predicated region
    $region74: #{tpu_custom_call.1} parent=1 // pred_check
      _
    $region75: #{tpu_custom_call.1} parent=1 // pred_check_branch
      %146 = sbr.rel (0) target = $region77
    $region76: #{tpu_custom_call.1} parent=1 // pred_region
      %147 = dma.done [#allocation15], 512
    $region77: #{tpu_custom_call.1} parent=1 // pred_fallthru
      _
    %v148 = vld [vmem:[#allocation2] sm:$0xff]
    %v149 = vld [vmem:[#allocation2 + $0x8] sm:$0xff]
    %v150 = vld [vmem:[#allocation2 + $0x10] sm:$0xff]
    %v151 = vld [vmem:[#allocation2 + $0x18] sm:$0xff]
    %v152 = vld [vmem:[#allocation5] sm:$0xff]
    %v153 = vld [vmem:[#allocation5 + $0x8] sm:$0xff]
    %v154 = vld [vmem:[#allocation5 + $0x10] sm:$0xff]
    %v155 = vld [vmem:[#allocation5 + $0x18] sm:$0xff]
    %v156 = vld [vmem:[#allocation7] sm:$0xff]
    %v157 = vld [vmem:[#allocation7 + $0x8] sm:$0xff]
    %v158 = vld [vmem:[#allocation7 + $0x10] sm:$0xff]
    %v159 = vld [vmem:[#allocation7 + $0x18] sm:$0xff]
    %v160 = vld [vmem:[#allocation8] sm:$0xff]
    %v161 = vld [vmem:[#allocation8 + $0x8] sm:$0xff]
    %v162 = vld [vmem:[#allocation8 + $0x10] sm:$0xff]
    %v163 = vld [vmem:[#allocation8 + $0x18] sm:$0xff]
    %vm164 = vcmask 261120
    %v166 = vsel %vm164, %v156, 0
    %v169 = vsel %vm164, %v157, 0
    %v172 = vsel %vm164, %v158, 0
    %v175 = vsel %vm164, %v159, 0
    %177 = vmatprep.subr.mxu0 0.0
    %178 = vmatpush1.msra.mxu0 %v148
    %179 = vmatprep.subr.mxu0 0.0
    %180 = vmatpush1.msra.mxu0 %v149
    %181 = vmatprep.subr.mxu0 0.0
    %182 = vmatpush1.msra.mxu0 %v150
    %183 = vmatprep.subr.mxu0 0.0
    %184 = vmatpush1.msra.mxu0 %v151
    %185 = vmatprep.subr.mxu0 0.0
    %186 = vmatpush1.msra.mxu0 0.0
    %187 = vmatprep.subr.mxu0 0.0
    %188 = vmatpush1.msra.mxu0 0.0
    %189 = vmatprep.subr.mxu0 0.0
    %190 = vmatpush1.msra.mxu0 0.0
    %191 = vmatprep.subr.mxu0 0.0
    %192 = vmatpush1.msra.mxu0 0.0
    %193 = vmatprep.subr.mxu0 0.0
    %194 = vmatpush1.msra.mxu0 0.0
    %195 = vmatprep.subr.mxu0 0.0
    %196 = vmatpush1.msra.mxu0 0.0
    %197 = vmatprep.subr.mxu0 0.0
    %198 = vmatpush1.msra.mxu0 0.0
    %199 = vmatprep.subr.mxu0 0.0
    %200 = vmatpush1.msra.mxu0 0.0
    %201 = vmatprep.subr.mxu0 0.0
    %202 = vmatpush1.msra.mxu0 0.0
    %203 = vmatprep.subr.mxu0 0.0
    %204 = vmatpush1.msra.mxu0 0.0
    %205 = vmatprep.subr.mxu0 0.0
    %206 = vmatpush1.msra.mxu0 0.0
    %207 = vmatprep.subr.mxu0 0.0
    %208 = vmatpush1.msra.mxu0 0.0
    %209 = vmatprep.subr.mxu0 0.0
    %210 = vmatpush1.msra.mxu0 0.0
    %211 = vmatprep.subr.mxu0 0.0
    %212 = vmatpush1.msra.mxu0 0.0
    %213 = vmatprep.subr.mxu0 0.0
    %214 = vmatpush1.msra.mxu0 0.0
    %215 = vmatprep.subr.mxu0 0.0
    %216 = vmatpush1.msra.mxu0 0.0
    %217 = vmatprep.subr.mxu0 0.0
    %218 = vmatpush1.msra.mxu0 0.0
    %219 = vmatprep.subr.mxu0 0.0
    %220 = vmatpush1.msra.mxu0 0.0
    %221 = vmatprep.subr.mxu0 0.0
    %222 = vmatpush1.msra.mxu0 0.0
    %223 = vmatprep.subr.mxu0 0.0
    %224 = vmatpush1.msra.mxu0 0.0
    %225 = vmatprep.subr.mxu0 0.0
    %226 = vmatpush1.msra.mxu0 0.0
    %227 = vmatprep.subr.mxu0 0.0
    %228 = vmatpush1.msra.mxu0 0.0
    %229 = vmatprep.subr.mxu0 0.0
    %230 = vmatpush1.msra.mxu0 0.0
    %231 = vmatprep.subr.mxu0 0.0
    %232 = vmatpush1.msra.mxu0 0.0
    %233 = vmatprep.subr.mxu0 0.0
    %234 = vmatpush1.msra.mxu0 0.0
    %235 = vmatprep.subr.mxu0 0.0
    %236 = vmatpush1.msra.mxu0 0.0
    %237 = vmatprep.subr.mxu0 0.0
    %238 = vmatpush1.msra.mxu0 0.0
    %239 = vmatprep.subr.mxu0 0.0
    %240 = vmatpush1.msra.mxu0 0.0
    %241 = vmatprep.mubr.f32.mxu0 0.0
    %242 = vmatmul.mubr.f32.gmra.mrb[0].mxu0 %v166
    %v243 = vpop.f32.mrb[0].mxu0
    %v244 = vadd.f32 0.0, %v243
    %v245 = vpop.f32.mrb[0].mxu0
    %246 = vmatprep.mubr.f32.mxu0 0.0
    %247 = vmatmul.mubr.f32.gmra.mrb[0].mxu0 %v169
    %v248 = vpop.f32.mrb[0].mxu0
    %v249 = vadd.f32 0.0, %v248
    %v250 = vpop.f32.mrb[0].mxu0
    %251 = vmatprep.mubr.f32.mxu0 0.0
    %252 = vmatmul.mubr.f32.gmra.mrb[0].mxu0 %v172
    %v253 = vpop.f32.mrb[0].mxu0
    %v254 = vadd.f32 0.0, %v253
    %v255 = vpop.f32.mrb[0].mxu0
    %256 = vmatprep.mubr.f32.mxu0 0.0
    %257 = vmatmul.mubr.f32.gmra.mrb[0].mxu0 %v175
    %v258 = vpop.f32.mrb[0].mxu0
    %v259 = vadd.f32 0.0, %v258
    %v260 = vpop.f32.mrb[0].mxu0
    %261 = vdwg.mxu0
    %v262 = vld [vmem:[#allocation10] sm:$0xff]
    %v263 = vld [vmem:[#allocation10 + $0x8] sm:$0xff]
    %v264 = vld [vmem:[#allocation10 + $0x10] sm:$0xff]
    %v265 = vld [vmem:[#allocation10 + $0x18] sm:$0xff]
    %s266 = scalar_lea.vmem [#allocation10], 32
    %v267 = vld [vmem:[%s266] sm:$0xff]
    %v268 = vld [vmem:[%s266 + $0x8] sm:$0xff]
    %v269 = vld [vmem:[%s266 + $0x10] sm:$0xff]
    %v270 = vld [vmem:[%s266 + $0x18] sm:$0xff]
    %v272 = vsel %vm164, %v148, 0
    %v275 = vsel %vm164, %v149, 0
    %v278 = vsel %vm164, %v150, 0
    %v281 = vsel %vm164, %v151, 0
    %283 = vmatprep.subr.mxu0 0.0
    %284 = vmatpush1.msra.mxu0 %v267
    %285 = vmatprep.subr.mxu0 0.0
    %286 = vmatpush1.msra.mxu0 %v268
    %287 = vmatprep.subr.mxu0 0.0
    %288 = vmatpush1.msra.mxu0 %v269
    %289 = vmatprep.subr.mxu0 0.0
    %290 = vmatpush1.msra.mxu0 %v270
    %291 = vmatprep.subr.mxu0 0.0
    %292 = vmatpush1.msra.mxu0 0.0
    %293 = vmatprep.subr.mxu0 0.0
    %294 = vmatpush1.msra.mxu0 0.0
    %295 = vmatprep.subr.mxu0 0.0
    %296 = vmatpush1.msra.mxu0 0.0
    %297 = vmatprep.subr.mxu0 0.0
    %298 = vmatpush1.msra.mxu0 0.0
    %299 = vmatprep.subr.mxu0 0.0
    %300 = vmatpush1.msra.mxu0 0.0
    %301 = vmatprep.subr.mxu0 0.0
    %302 = vmatpush1.msra.mxu0 0.0
    %303 = vmatprep.subr.mxu0 0.0
    %304 = vmatpush1.msra.mxu0 0.0
    %305 = vmatprep.subr.mxu0 0.0
    %306 = vmatpush1.msra.mxu0 0.0
    %307 = vmatprep.subr.mxu0 0.0
    %308 = vmatpush1.msra.mxu0 0.0
    %309 = vmatprep.subr.mxu0 0.0
    %310 = vmatpush1.msra.mxu0 0.0
    %311 = vmatprep.subr.mxu0 0.0
    %312 = vmatpush1.msra.mxu0 0.0
    %313 = vmatprep.subr.mxu0 0.0
    %314 = vmatpush1.msra.mxu0 0.0
    %315 = vmatprep.subr.mxu0 0.0
    %316 = vmatpush1.msra.mxu0 0.0
    %317 = vmatprep.subr.mxu0 0.0
    %318 = vmatpush1.msra.mxu0 0.0
    %319 = vmatprep.subr.mxu0 0.0
    %320 = vmatpush1.msra.mxu0 0.0
    %321 = vmatprep.subr.mxu0 0.0
    %322 = vmatpush1.msra.mxu0 0.0
    %323 = vmatprep.subr.mxu0 0.0
    %324 = vmatpush1.msra.mxu0 0.0
    %325 = vmatprep.subr.mxu0 0.0
    %326 = vmatpush1.msra.mxu0 0.0
    %327 = vmatprep.subr.mxu0 0.0
    %328 = vmatpush1.msra.mxu0 0.0
    %329 = vmatprep.subr.mxu0 0.0
    %330 = vmatpush1.msra.mxu0 0.0
    %331 = vmatprep.subr.mxu0 0.0
    %332 = vmatpush1.msra.mxu0 0.0
    %333 = vmatprep.subr.mxu0 0.0
    %334 = vmatpush1.msra.mxu0 0.0
    %335 = vmatprep.subr.mxu0 0.0
    %336 = vmatpush1.msra.mxu0 0.0
    %337 = vmatprep.subr.mxu0 0.0
    %338 = vmatpush1.msra.mxu0 0.0
    %339 = vmatprep.subr.mxu0 0.0
    %340 = vmatpush1.msra.mxu0 0.0
    %341 = vmatprep.subr.mxu0 0.0
    %342 = vmatpush1.msra.mxu0 0.0
    %343 = vmatprep.subr.mxu0 0.0
    %344 = vmatpush1.msra.mxu0 0.0
    %345 = vmatprep.subr.mxu0 0.0
    %346 = vmatpush1.msra.mxu0 0.0
    %347 = vmatprep.mubr.f32.mxu0 0.0
    %348 = vmatmul.mubr.f32.gmra.mrb[0].mxu0 %v272
    %v349 = vpop.f32.mrb[0].mxu0
    %v350 = vadd.f32 0.0, %v349
    %v351 = vpop.f32.mrb[0].mxu0
    %352 = vmatprep.mubr.f32.mxu0 0.0
    %353 = vmatmul.mubr.f32.gmra.mrb[0].mxu0 %v275
    %v354 = vpop.f32.mrb[0].mxu0
    %v355 = vadd.f32 0.0, %v354
    %v356 = vpop.f32.mrb[0].mxu0
    %357 = vmatprep.mubr.f32.mxu0 0.0
    %358 = vmatmul.mubr.f32.gmra.mrb[0].mxu0 %v278
    %v359 = vpop.f32.mrb[0].mxu0
    %v360 = vadd.f32 0.0, %v359
    %v361 = vpop.f32.mrb[0].mxu0
    %362 = vmatprep.mubr.f32.mxu0 0.0
    %363 = vmatmul.mubr.f32.gmra.mrb[0].mxu0 %v281
    %v364 = vpop.f32.mrb[0].mxu0
    %v365 = vadd.f32 0.0, %v364
    %v366 = vpop.f32.mrb[0].mxu0
    %367 = vdwg.mxu0
    %v369 = vsel %vm164, %v244, 0
    %v372 = vsel %vm164, %v249, 0
    %v375 = vsel %vm164, %v254, 0
    %v378 = vsel %vm164, %v259, 0
    %380 = vmatprep.subr.mxu0 0.0
    %381 = vmatpush1.msra.mxu0 %v262
    %382 = vmatprep.subr.mxu0 0.0
    %383 = vmatpush1.msra.mxu0 %v263
    %384 = vmatprep.subr.mxu0 0.0
    %385 = vmatpush1.msra.mxu0 %v264
    %386 = vmatprep.subr.mxu0 0.0
    %387 = vmatpush1.msra.mxu0 %v265
    %388 = vmatprep.subr.mxu0 0.0
    %389 = vmatpush1.msra.mxu0 0.0
    %390 = vmatprep.subr.mxu0 0.0
    %391 = vmatpush1.msra.mxu0 0.0
    %392 = vmatprep.subr.mxu0 0.0
    %393 = vmatpush1.msra.mxu0 0.0
    %394 = vmatprep.subr.mxu0 0.0
    %395 = vmatpush1.msra.mxu0 0.0
    %396 = vmatprep.subr.mxu0 0.0
    %397 = vmatpush1.msra.mxu0 0.0
    %398 = vmatprep.subr.mxu0 0.0
    %399 = vmatpush1.msra.mxu0 0.0
    %400 = vmatprep.subr.mxu0 0.0
    %401 = vmatpush1.msra.mxu0 0.0
    %402 = vmatprep.subr.mxu0 0.0
    %403 = vmatpush1.msra.mxu0 0.0
    %404 = vmatprep.subr.mxu0 0.0
    %405 = vmatpush1.msra.mxu0 0.0
    %406 = vmatprep.subr.mxu0 0.0
    %407 = vmatpush1.msra.mxu0 0.0
    %408 = vmatprep.subr.mxu0 0.0
    %409 = vmatpush1.msra.mxu0 0.0
    %410 = vmatprep.subr.mxu0 0.0
    %411 = vmatpush1.msra.mxu0 0.0
    %412 = vmatprep.subr.mxu0 0.0
    %413 = vmatpush1.msra.mxu0 0.0
    %414 = vmatprep.subr.mxu0 0.0
    %415 = vmatpush1.msra.mxu0 0.0
    %416 = vmatprep.subr.mxu0 0.0
    %417 = vmatpush1.msra.mxu0 0.0
    %418 = vmatprep.subr.mxu0 0.0
    %419 = vmatpush1.msra.mxu0 0.0
    %420 = vmatprep.subr.mxu0 0.0
    %421 = vmatpush1.msra.mxu0 0.0
    %422 = vmatprep.subr.mxu0 0.0
    %423 = vmatpush1.msra.mxu0 0.0
    %424 = vmatprep.subr.mxu0 0.0
    %425 = vmatpush1.msra.mxu0 0.0
    %426 = vmatprep.subr.mxu0 0.0
    %427 = vmatpush1.msra.mxu0 0.0
    %428 = vmatprep.subr.mxu0 0.0
    %429 = vmatpush1.msra.mxu0 0.0
    %430 = vmatprep.subr.mxu0 0.0
    %431 = vmatpush1.msra.mxu0 0.0
    %432 = vmatprep.subr.mxu0 0.0
    %433 = vmatpush1.msra.mxu0 0.0
    %434 = vmatprep.subr.mxu0 0.0
    %435 = vmatpush1.msra.mxu0 0.0
    %436 = vmatprep.subr.mxu0 0.0
    %437 = vmatpush1.msra.mxu0 0.0
    %438 = vmatprep.subr.mxu0 0.0
    %439 = vmatpush1.msra.mxu0 0.0
    %440 = vmatprep.subr.mxu0 0.0
    %441 = vmatpush1.msra.mxu0 0.0
    %442 = vmatprep.subr.mxu0 0.0
    %443 = vmatpush1.msra.mxu0 0.0
    %444 = vmatprep.mubr.f32.mxu0 0.0
    %445 = vmatmul.mubr.f32.gmra.mrb[0].mxu0 %v369
    %v446 = vpop.f32.mrb[0].mxu0
    %v447 = vadd.f32 %v350, %v446
    %v448 = vpop.f32.mrb[0].mxu0
    %449 = vmatprep.mubr.f32.mxu0 0.0
    %450 = vmatmul.mubr.f32.gmra.mrb[0].mxu0 %v372
    %v451 = vpop.f32.mrb[0].mxu0
    %v452 = vadd.f32 %v355, %v451
    %v453 = vpop.f32.mrb[0].mxu0
    %454 = vmatprep.mubr.f32.mxu0 0.0
    %455 = vmatmul.mubr.f32.gmra.mrb[0].mxu0 %v375
    %v456 = vpop.f32.mrb[0].mxu0
    %v457 = vadd.f32 %v360, %v456
    %v458 = vpop.f32.mrb[0].mxu0
    %459 = vmatprep.mubr.f32.mxu0 0.0
    %460 = vmatmul.mubr.f32.gmra.mrb[0].mxu0 %v378
    %v461 = vpop.f32.mrb[0].mxu0
    %v462 = vadd.f32 %v365, %v461
    %v463 = vpop.f32.mrb[0].mxu0
    %464 = vdwg.mxu0
    %v466 = vsel %vm164, %v160, 0
    %v469 = vsel %vm164, %v161, 0
    %v472 = vsel %vm164, %v162, 0
    %v475 = vsel %vm164, %v163, 0
    %477 = vmatprep.subr.mxu0 0.0
    %478 = vmatpush1.msra.mxu0 %v148
    %479 = vmatprep.subr.mxu0 0.0
    %480 = vmatpush1.msra.mxu0 %v149
    %481 = vmatprep.subr.mxu0 0.0
    %482 = vmatpush1.msra.mxu0 %v150
    %483 = vmatprep.subr.mxu0 0.0
    %484 = vmatpush1.msra.mxu0 %v151
    %485 = vmatprep.subr.mxu0 0.0
    %486 = vmatpush1.msra.mxu0 0.0
    %487 = vmatprep.subr.mxu0 0.0
    %488 = vmatpush1.msra.mxu0 0.0
    %489 = vmatprep.subr.mxu0 0.0
    %490 = vmatpush1.msra.mxu0 0.0
    %491 = vmatprep.subr.mxu0 0.0
    %492 = vmatpush1.msra.mxu0 0.0
    %493 = vmatprep.subr.mxu0 0.0
    %494 = vmatpush1.msra.mxu0 0.0
    %495 = vmatprep.subr.mxu0 0.0
    %496 = vmatpush1.msra.mxu0 0.0
    %497 = vmatprep.subr.mxu0 0.0
    %498 = vmatpush1.msra.mxu0 0.0
    %499 = vmatprep.subr.mxu0 0.0
    %500 = vmatpush1.msra.mxu0 0.0
    %501 = vmatprep.subr.mxu0 0.0
    %502 = vmatpush1.msra.mxu0 0.0
    %503 = vmatprep.subr.mxu0 0.0
    %504 = vmatpush1.msra.mxu0 0.0
    %505 = vmatprep.subr.mxu0 0.0
    %506 = vmatpush1.msra.mxu0 0.0
    %507 = vmatprep.subr.mxu0 0.0
    %508 = vmatpush1.msra.mxu0 0.0
    %509 = vmatprep.subr.mxu0 0.0
    %510 = vmatpush1.msra.mxu0 0.0
    %511 = vmatprep.subr.mxu0 0.0
    %512 = vmatpush1.msra.mxu0 0.0
    %513 = vmatprep.subr.mxu0 0.0
    %514 = vmatpush1.msra.mxu0 0.0
    %515 = vmatprep.subr.mxu0 0.0
    %516 = vmatpush1.msra.mxu0 0.0
    %517 = vmatprep.subr.mxu0 0.0
    %518 = vmatpush1.msra.mxu0 0.0
    %519 = vmatprep.subr.mxu0 0.0
    %520 = vmatpush1.msra.mxu0 0.0
    %521 = vmatprep.subr.mxu0 0.0
    %522 = vmatpush1.msra.mxu0 0.0
    %523 = vmatprep.subr.mxu0 0.0
    %524 = vmatpush1.msra.mxu0 0.0
    %525 = vmatprep.subr.mxu0 0.0
    %526 = vmatpush1.msra.mxu0 0.0
    %527 = vmatprep.subr.mxu0 0.0
    %528 = vmatpush1.msra.mxu0 0.0
    %529 = vmatprep.subr.mxu0 0.0
    %530 = vmatpush1.msra.mxu0 0.0
    %531 = vmatprep.subr.mxu0 0.0
    %532 = vmatpush1.msra.mxu0 0.0
    %533 = vmatprep.subr.mxu0 0.0
    %534 = vmatpush1.msra.mxu0 0.0
    %535 = vmatprep.subr.mxu0 0.0
    %536 = vmatpush1.msra.mxu0 0.0
    %537 = vmatprep.subr.mxu0 0.0
    %538 = vmatpush1.msra.mxu0 0.0
    %539 = vmatprep.subr.mxu0 0.0
    %540 = vmatpush1.msra.mxu0 0.0
    %541 = vmatprep.mubr.f32.mxu0 0.0
    %542 = vmatmul.mubr.f32.gmra.mrb[0].mxu0 %v466
    %v543 = vpop.f32.mrb[0].mxu0
    %v544 = vadd.f32 0.0, %v543
    %v545 = vpop.f32.mrb[0].mxu0
    %546 = vmatprep.mubr.f32.mxu0 0.0
    %547 = vmatmul.mubr.f32.gmra.mrb[0].mxu0 %v469
    %v548 = vpop.f32.mrb[0].mxu0
    %v549 = vadd.f32 0.0, %v548
    %v550 = vpop.f32.mrb[0].mxu0
    %551 = vmatprep.mubr.f32.mxu0 0.0
    %552 = vmatmul.mubr.f32.gmra.mrb[0].mxu0 %v472
    %v553 = vpop.f32.mrb[0].mxu0
    %v554 = vadd.f32 0.0, %v553
    %v555 = vpop.f32.mrb[0].mxu0
    %556 = vmatprep.mubr.f32.mxu0 0.0
    %557 = vmatmul.mubr.f32.gmra.mrb[0].mxu0 %v475
    %v558 = vpop.f32.mrb[0].mxu0
    %v559 = vadd.f32 0.0, %v558
    %v560 = vpop.f32.mrb[0].mxu0
    %561 = vdwg.mxu0
    %s562 = scalar_lea.vmem [#allocation10], 64
    %v563 = vld [vmem:[%s562] sm:$0xff]
    %v564 = vld [vmem:[%s562 + $0x8] sm:$0xff]
    %v565 = vld [vmem:[%s562 + $0x10] sm:$0xff]
    %v566 = vld [vmem:[%s562 + $0x18] sm:$0xff]
    %v568 = vsel %vm164, %v544, 0
    %v571 = vsel %vm164, %v549, 0
    %v574 = vsel %vm164, %v554, 0
    %v577 = vsel %vm164, %v559, 0
    %579 = vmatprep.subr.mxu0 0.0
    %580 = vmatpush1.msra.mxu0 %v563
    %581 = vmatprep.subr.mxu0 0.0
    %582 = vmatpush1.msra.mxu0 %v564
    %583 = vmatprep.subr.mxu0 0.0
    %584 = vmatpush1.msra.mxu0 %v565
    %585 = vmatprep.subr.mxu0 0.0
    %586 = vmatpush1.msra.mxu0 %v566
    %587 = vmatprep.subr.mxu0 0.0
    %588 = vmatpush1.msra.mxu0 0.0
    %589 = vmatprep.subr.mxu0 0.0
    %590 = vmatpush1.msra.mxu0 0.0
    %591 = vmatprep.subr.mxu0 0.0
    %592 = vmatpush1.msra.mxu0 0.0
    %593 = vmatprep.subr.mxu0 0.0
    %594 = vmatpush1.msra.mxu0 0.0
    %595 = vmatprep.subr.mxu0 0.0
    %596 = vmatpush1.msra.mxu0 0.0
    %597 = vmatprep.subr.mxu0 0.0
    %598 = vmatpush1.msra.mxu0 0.0
    %599 = vmatprep.subr.mxu0 0.0
    %600 = vmatpush1.msra.mxu0 0.0
    %601 = vmatprep.subr.mxu0 0.0
    %602 = vmatpush1.msra.mxu0 0.0
    %603 = vmatprep.subr.mxu0 0.0
    %604 = vmatpush1.msra.mxu0 0.0
    %605 = vmatprep.subr.mxu0 0.0
    %606 = vmatpush1.msra.mxu0 0.0
    %607 = vmatprep.subr.mxu0 0.0
    %608 = vmatpush1.msra.mxu0 0.0
    %609 = vmatprep.subr.mxu0 0.0
    %610 = vmatpush1.msra.mxu0 0.0
    %611 = vmatprep.subr.mxu0 0.0
    %612 = vmatpush1.msra.mxu0 0.0
    %613 = vmatprep.subr.mxu0 0.0
    %614 = vmatpush1.msra.mxu0 0.0
    %615 = vmatprep.subr.mxu0 0.0
    %616 = vmatpush1.msra.mxu0 0.0
    %617 = vmatprep.subr.mxu0 0.0
    %618 = vmatpush1.msra.mxu0 0.0
    %619 = vmatprep.subr.mxu0 0.0
    %620 = vmatpush1.msra.mxu0 0.0
    %621 = vmatprep.subr.mxu0 0.0
    %622 = vmatpush1.msra.mxu0 0.0
    %623 = vmatprep.subr.mxu0 0.0
    %624 = vmatpush1.msra.mxu0 0.0
    %625 = vmatprep.subr.mxu0 0.0
    %626 = vmatpush1.msra.mxu0 0.0
    %627 = vmatprep.subr.mxu0 0.0
    %628 = vmatpush1.msra.mxu0 0.0
    %629 = vmatprep.subr.mxu0 0.0
    %630 = vmatpush1.msra.mxu0 0.0
    %631 = vmatprep.subr.mxu0 0.0
    %632 = vmatpush1.msra.mxu0 0.0
    %633 = vmatprep.subr.mxu0 0.0
    %634 = vmatpush1.msra.mxu0 0.0
    %635 = vmatprep.subr.mxu0 0.0
    %636 = vmatpush1.msra.mxu0 0.0
    %637 = vmatprep.subr.mxu0 0.0
    %638 = vmatpush1.msra.mxu0 0.0
    %639 = vmatprep.subr.mxu0 0.0
    %640 = vmatpush1.msra.mxu0 0.0
    %641 = vmatprep.subr.mxu0 0.0
    %642 = vmatpush1.msra.mxu0 0.0
    %643 = vmatprep.mubr.f32.mxu0 0.0
    %644 = vmatmul.mubr.f32.gmra.mrb[0].mxu0 %v568
    %v645 = vpop.f32.mrb[0].mxu0
    %v646 = vadd.f32 0.0, %v645
    %v647 = vpop.f32.mrb[0].mxu0
    %648 = vmatprep.mubr.f32.mxu0 0.0
    %649 = vmatmul.mubr.f32.gmra.mrb[0].mxu0 %v571
    %v650 = vpop.f32.mrb[0].mxu0
    %v651 = vadd.f32 0.0, %v650
    %v652 = vpop.f32.mrb[0].mxu0
    %653 = vmatprep.mubr.f32.mxu0 0.0
    %654 = vmatmul.mubr.f32.gmra.mrb[0].mxu0 %v574
    %v655 = vpop.f32.mrb[0].mxu0
    %v656 = vadd.f32 0.0, %v655
    %v657 = vpop.f32.mrb[0].mxu0
    %658 = vmatprep.mubr.f32.mxu0 0.0
    %659 = vmatmul.mubr.f32.gmra.mrb[0].mxu0 %v577
    %v660 = vpop.f32.mrb[0].mxu0
    %v661 = vadd.f32 0.0, %v660
    %v662 = vpop.f32.mrb[0].mxu0
    %663 = vdwg.mxu0
    %v664 = vadd.f32 %v447, %v646
    %v665 = vadd.f32 %v452, %v651
    %v666 = vadd.f32 %v457, %v656
    %v667 = vadd.f32 %v462, %v661
    %v668 = vld [vmem:[%s5] sm:$0x1]
    %v670 = vlaneseq
    %v671 = vshrl.u32 %v670, 7
    %v672 = vsub.s32 0, %v671
    %v673 = vrot.slane %v668, %v672
    %v675 = vadd.f32 %v664, %v673
    %v676 = vadd.f32 %v665, %v673
    %v677 = vadd.f32 %v666, %v673
    %v678 = vadd.f32 %v667, %v673
    %v679 = vsub.f32 0.0, %v675
    %v680 = vsub.f32 0.0, %v676
    %v681 = vsub.f32 0.0, %v677
    %v682 = vsub.f32 0.0, %v678
    %v683 = vmul.f32 %v679, 1.442695
    %v684 = vpow.pop %v683
    %v685 = vmul.f32 %v680, 1.442695
    %v686 = vpow.pop %v685
    %v687 = vmul.f32 %v681, 1.442695
    %v688 = vpow.pop %v687
    %v689 = vmul.f32 %v682, 1.442695
    %v690 = vpow.pop %v689
    %v691 = vadd.f32 %v684, 1.0
    %v692 = vadd.f32 %v686, 1.0
    %v693 = vadd.f32 %v688, 1.0
    %v694 = vadd.f32 %v690, 1.0
    %v695 = vrcp.pop %v691
    %v696 = vmul.f32 1.0, %v695
    %v697 = vrcp.pop %v692
    %v698 = vmul.f32 1.0, %v697
    %v699 = vrcp.pop %v693
    %v700 = vmul.f32 1.0, %v699
    %v701 = vrcp.pop %v694
    %v702 = vmul.f32 1.0, %v701
    %v703 = vmul.f32 %v675, %v696
    %v704 = vmul.f32 %v676, %v698
    %v705 = vmul.f32 %v677, %v700
    %v706 = vmul.f32 %v678, %v702
    %707 = vmatprep.subr.mxu0 0.0
    %708 = vmatpush1.msra.mxu0 %v703
    %709 = vmatprep.subr.mxu0 0.0
    %710 = vmatpush1.msra.mxu0 %v704
    %711 = vmatprep.subr.mxu0 0.0
    %712 = vmatpush1.msra.mxu0 %v705
    %713 = vmatprep.subr.mxu0 0.0
    %714 = vmatpush1.msra.mxu0 %v706
    %715 = vmatprep.subr.mxu0 0.0
    %716 = vmatpush1.msra.mxu0 0.0
    %717 = vmatprep.subr.mxu0 0.0
    %718 = vmatpush1.msra.mxu0 0.0
    %719 = vmatprep.subr.mxu0 0.0
    %720 = vmatpush1.msra.mxu0 0.0
    %721 = vmatprep.subr.mxu0 0.0
    %722 = vmatpush1.msra.mxu0 0.0
    %723 = vmatprep.subr.mxu0 0.0
    %724 = vmatpush1.msra.mxu0 0.0
    %725 = vmatprep.subr.mxu0 0.0
    %726 = vmatpush1.msra.mxu0 0.0
    %727 = vmatprep.subr.mxu0 0.0
    %728 = vmatpush1.msra.mxu0 0.0
    %729 = vmatprep.subr.mxu0 0.0
    %730 = vmatpush1.msra.mxu0 0.0
    %731 = vmatprep.subr.mxu0 0.0
    %732 = vmatpush1.msra.mxu0 0.0
    %733 = vmatprep.subr.mxu0 0.0
    %734 = vmatpush1.msra.mxu0 0.0
    %735 = vmatprep.subr.mxu0 0.0
    %736 = vmatpush1.msra.mxu0 0.0
    %737 = vmatprep.subr.mxu0 0.0
    %738 = vmatpush1.msra.mxu0 0.0
    %739 = vmatprep.subr.mxu0 0.0
    %740 = vmatpush1.msra.mxu0 0.0
    %741 = vmatprep.subr.mxu0 0.0
    %742 = vmatpush1.msra.mxu0 0.0
    %743 = vmatprep.subr.mxu0 0.0
    %744 = vmatpush1.msra.mxu0 0.0
    %745 = vmatprep.subr.mxu0 0.0
    %746 = vmatpush1.msra.mxu0 0.0
    %747 = vmatprep.subr.mxu0 0.0
    %748 = vmatpush1.msra.mxu0 0.0
    %749 = vmatprep.subr.mxu0 0.0
    %750 = vmatpush1.msra.mxu0 0.0
    %751 = vmatprep.subr.mxu0 0.0
    %752 = vmatpush1.msra.mxu0 0.0
    %753 = vmatprep.subr.mxu0 0.0
    %754 = vmatpush1.msra.mxu0 0.0
    %755 = vmatprep.subr.mxu0 0.0
    %756 = vmatpush1.msra.mxu0 0.0
    %757 = vmatprep.subr.mxu0 0.0
    %758 = vmatpush1.msra.mxu0 0.0
    %759 = vmatprep.subr.mxu0 0.0
    %760 = vmatpush1.msra.mxu0 0.0
    %761 = vmatprep.subr.mxu0 0.0
    %762 = vmatpush1.msra.mxu0 0.0
    %763 = vmatprep.subr.mxu0 0.0
    %764 = vmatpush1.msra.mxu0 0.0
    %765 = vmatprep.subr.mxu0 0.0
    %766 = vmatpush1.msra.mxu0 0.0
    %767 = vmatprep.subr.mxu0 0.0
    %768 = vmatpush1.msra.mxu0 0.0
    %769 = vmatprep.subr.mxu0 0.0
    %770 = vmatpush1.msra.mxu0 0.0
    %771 = vmatprep.mubr.f32.mxu0 0.0
    %772 = vmatmul.mubr.f32.gmra.mrb[0].mxu0 %v166
    %v773 = vpop.f32.mrb[0].mxu0
    %v774 = vadd.f32 0.0, %v773
    %v775 = vpop.f32.mrb[0].mxu0
    %776 = vmatprep.mubr.f32.mxu0 0.0
    %777 = vmatmul.mubr.f32.gmra.mrb[0].mxu0 %v169
    %v778 = vpop.f32.mrb[0].mxu0
    %v779 = vadd.f32 0.0, %v778
    %v780 = vpop.f32.mrb[0].mxu0
    %781 = vmatprep.mubr.f32.mxu0 0.0
    %782 = vmatmul.mubr.f32.gmra.mrb[0].mxu0 %v172
    %v783 = vpop.f32.mrb[0].mxu0
    %v784 = vadd.f32 0.0, %v783
    %v785 = vpop.f32.mrb[0].mxu0
    %786 = vmatprep.mubr.f32.mxu0 0.0
    %787 = vmatmul.mubr.f32.gmra.mrb[0].mxu0 %v175
    %v788 = vpop.f32.mrb[0].mxu0
    %v789 = vadd.f32 0.0, %v788
    %v790 = vpop.f32.mrb[0].mxu0
    %791 = vdwg.mxu0
    %v792 = vld [vmem:[#allocation11] sm:$0xff]
    %v793 = vld [vmem:[#allocation11 + $0x8] sm:$0xff]
    %v794 = vld [vmem:[#allocation11 + $0x10] sm:$0xff]
    %v795 = vld [vmem:[#allocation11 + $0x18] sm:$0xff]
    %v796 = vld [vmem:[#allocation11 + $0x20] sm:$0xff]
    %v797 = vld [vmem:[#allocation11 + $0x28] sm:$0xff]
    %v798 = vld [vmem:[#allocation11 + $0x30] sm:$0xff]
    %v799 = vld [vmem:[#allocation11 + $0x38] sm:$0xff]
    %v800 = vld [vmem:[#allocation11 + $0x40] sm:$0xff]
    %v801 = vld [vmem:[#allocation11 + $0x48] sm:$0xff]
    %v802 = vld [vmem:[#allocation11 + $0x50] sm:$0xff]
    %v803 = vld [vmem:[#allocation11 + $0x58] sm:$0xff]
    %v804 = vld [vmem:[#allocation11 + $0x60] sm:$0xff]
    %v805 = vld [vmem:[#allocation11 + $0x68] sm:$0xff]
    %v806 = vld [vmem:[#allocation11 + $0x70] sm:$0xff]
    %v807 = vld [vmem:[#allocation11 + $0x78] sm:$0xff]
    %s808 = scalar_lea.vmem [#allocation11], 128
    %v809 = vld [vmem:[%s808] sm:$0xff]
    %v810 = vld [vmem:[%s808 + $0x8] sm:$0xff]
    %v811 = vld [vmem:[%s808 + $0x10] sm:$0xff]
    %v812 = vld [vmem:[%s808 + $0x18] sm:$0xff]
    %v813 = vld [vmem:[%s808 + $0x20] sm:$0xff]
    %v814 = vld [vmem:[%s808 + $0x28] sm:$0xff]
    %v815 = vld [vmem:[%s808 + $0x30] sm:$0xff]
    %v816 = vld [vmem:[%s808 + $0x38] sm:$0xff]
    %v817 = vld [vmem:[%s808 + $0x40] sm:$0xff]
    %v818 = vld [vmem:[%s808 + $0x48] sm:$0xff]
    %v819 = vld [vmem:[%s808 + $0x50] sm:$0xff]
    %v820 = vld [vmem:[%s808 + $0x58] sm:$0xff]
    %v821 = vld [vmem:[%s808 + $0x60] sm:$0xff]
    %v822 = vld [vmem:[%s808 + $0x68] sm:$0xff]
    %v823 = vld [vmem:[%s808 + $0x70] sm:$0xff]
    %v824 = vld [vmem:[%s808 + $0x78] sm:$0xff]
    %825 = vmatprep.subr.mxu0 0.0
    %826 = vmatpush1.msra.mxu0 %v809
    %827 = vmatprep.subr.mxu0 0.0
    %828 = vmatpush1.msra.mxu0 %v810
    %829 = vmatprep.subr.mxu0 0.0
    %830 = vmatpush1.msra.mxu0 %v811
    %831 = vmatprep.subr.mxu0 0.0
    %832 = vmatpush1.msra.mxu0 %v812
    %833 = vmatprep.subr.mxu0 0.0
    %834 = vmatpush1.msra.mxu0 %v813
    %835 = vmatprep.subr.mxu0 0.0
    %836 = vmatpush1.msra.mxu0 %v814
    %837 = vmatprep.subr.mxu0 0.0
    %838 = vmatpush1.msra.mxu0 %v815
    %839 = vmatprep.subr.mxu0 0.0
    %840 = vmatpush1.msra.mxu0 %v816
    %841 = vmatprep.subr.mxu0 0.0
    %842 = vmatpush1.msra.mxu0 %v817
    %843 = vmatprep.subr.mxu0 0.0
    %844 = vmatpush1.msra.mxu0 %v818
    %845 = vmatprep.subr.mxu0 0.0
    %846 = vmatpush1.msra.mxu0 %v819
    %847 = vmatprep.subr.mxu0 0.0
    %848 = vmatpush1.msra.mxu0 %v820
    %849 = vmatprep.subr.mxu0 0.0
    %850 = vmatpush1.msra.mxu0 %v821
    %851 = vmatprep.subr.mxu0 0.0
    %852 = vmatpush1.msra.mxu0 %v822
    %853 = vmatprep.subr.mxu0 0.0
    %854 = vmatpush1.msra.mxu0 %v823
    %855 = vmatprep.subr.mxu0 0.0
    %856 = vmatpush1.msra.mxu0 %v824
    %857 = vmatprep.subr.mxu0 0.0
    %858 = vmatpush1.msra.mxu0 0.0
    %859 = vmatprep.subr.mxu0 0.0
    %860 = vmatpush1.msra.mxu0 0.0
    %861 = vmatprep.subr.mxu0 0.0
    %862 = vmatpush1.msra.mxu0 0.0
    %863 = vmatprep.subr.mxu0 0.0
    %864 = vmatpush1.msra.mxu0 0.0
    %865 = vmatprep.subr.mxu0 0.0
    %866 = vmatpush1.msra.mxu0 0.0
    %867 = vmatprep.subr.mxu0 0.0
    %868 = vmatpush1.msra.mxu0 0.0
    %869 = vmatprep.subr.mxu0 0.0
    %870 = vmatpush1.msra.mxu0 0.0
    %871 = vmatprep.subr.mxu0 0.0
    %872 = vmatpush1.msra.mxu0 0.0
    %873 = vmatprep.subr.mxu0 0.0
    %874 = vmatpush1.msra.mxu0 0.0
    %875 = vmatprep.subr.mxu0 0.0
    %876 = vmatpush1.msra.mxu0 0.0
    %877 = vmatprep.subr.mxu0 0.0
    %878 = vmatpush1.msra.mxu0 0.0
    %879 = vmatprep.subr.mxu0 0.0
    %880 = vmatpush1.msra.mxu0 0.0
    %881 = vmatprep.subr.mxu0 0.0
    %882 = vmatpush1.msra.mxu0 0.0
    %883 = vmatprep.subr.mxu0 0.0
    %884 = vmatpush1.msra.mxu0 0.0
    %885 = vmatprep.subr.mxu0 0.0
    %886 = vmatpush1.msra.mxu0 0.0
    %887 = vmatprep.subr.mxu0 0.0
    %888 = vmatpush1.msra.mxu0 0.0
    %889 = vmatprep.mubr.f32.mxu0 0.0
    %890 = vmatmul.mubr.f32.gmra.mrb[0].mxu0 %v703
    %v891 = vpop.f32.mrb[0].mxu0
    %v892 = vadd.f32 0.0, %v891
    %v893 = vpop.f32.mrb[0].mxu0
    %894 = vmatprep.mubr.f32.mxu0 0.0
    %895 = vmatmul.mubr.f32.gmra.mrb[0].mxu0 %v704
    %v896 = vpop.f32.mrb[0].mxu0
    %v897 = vadd.f32 0.0, %v896
    %v898 = vpop.f32.mrb[0].mxu0
    %899 = vmatprep.mubr.f32.mxu0 0.0
    %900 = vmatmul.mubr.f32.gmra.mrb[0].mxu0 %v705
    %v901 = vpop.f32.mrb[0].mxu0
    %v902 = vadd.f32 0.0, %v901
    %v903 = vpop.f32.mrb[0].mxu0
    %904 = vmatprep.mubr.f32.mxu0 0.0
    %905 = vmatmul.mubr.f32.gmra.mrb[0].mxu0 %v706
    %v906 = vpop.f32.mrb[0].mxu0
    %v907 = vadd.f32 0.0, %v906
    %v908 = vpop.f32.mrb[0].mxu0
    %909 = vdwg.mxu0
    %910 = vmatprep.subr.mxu0 0.0
    %911 = vmatpush1.msra.mxu0 %v792
    %912 = vmatprep.subr.mxu0 0.0
    %913 = vmatpush1.msra.mxu0 %v793
    %914 = vmatprep.subr.mxu0 0.0
    %915 = vmatpush1.msra.mxu0 %v794
    %916 = vmatprep.subr.mxu0 0.0
    %917 = vmatpush1.msra.mxu0 %v795
    %918 = vmatprep.subr.mxu0 0.0
    %919 = vmatpush1.msra.mxu0 %v796
    %920 = vmatprep.subr.mxu0 0.0
    %921 = vmatpush1.msra.mxu0 %v797
    %922 = vmatprep.subr.mxu0 0.0
    %923 = vmatpush1.msra.mxu0 %v798
    %924 = vmatprep.subr.mxu0 0.0
    %925 = vmatpush1.msra.mxu0 %v799
    %926 = vmatprep.subr.mxu0 0.0
    %927 = vmatpush1.msra.mxu0 %v800
    %928 = vmatprep.subr.mxu0 0.0
    %929 = vmatpush1.msra.mxu0 %v801
    %930 = vmatprep.subr.mxu0 0.0
    %931 = vmatpush1.msra.mxu0 %v802
    %932 = vmatprep.subr.mxu0 0.0
    %933 = vmatpush1.msra.mxu0 %v803
    %934 = vmatprep.subr.mxu0 0.0
    %935 = vmatpush1.msra.mxu0 %v804
    %936 = vmatprep.subr.mxu0 0.0
    %937 = vmatpush1.msra.mxu0 %v805
    %938 = vmatprep.subr.mxu0 0.0
    %939 = vmatpush1.msra.mxu0 %v806
    %940 = vmatprep.subr.mxu0 0.0
    %941 = vmatpush1.msra.mxu0 %v807
    %942 = vmatprep.subr.mxu0 0.0
    %943 = vmatpush1.msra.mxu0 0.0
    %944 = vmatprep.subr.mxu0 0.0
    %945 = vmatpush1.msra.mxu0 0.0
    %946 = vmatprep.subr.mxu0 0.0
    %947 = vmatpush1.msra.mxu0 0.0
    %948 = vmatprep.subr.mxu0 0.0
    %949 = vmatpush1.msra.mxu0 0.0
    %950 = vmatprep.subr.mxu0 0.0
    %951 = vmatpush1.msra.mxu0 0.0
    %952 = vmatprep.subr.mxu0 0.0
    %953 = vmatpush1.msra.mxu0 0.0
    %954 = vmatprep.subr.mxu0 0.0
    %955 = vmatpush1.msra.mxu0 0.0
    %956 = vmatprep.subr.mxu0 0.0
    %957 = vmatpush1.msra.mxu0 0.0
    %958 = vmatprep.subr.mxu0 0.0
    %959 = vmatpush1.msra.mxu0 0.0
    %960 = vmatprep.subr.mxu0 0.0
    %961 = vmatpush1.msra.mxu0 0.0
    %962 = vmatprep.subr.mxu0 0.0
    %963 = vmatpush1.msra.mxu0 0.0
    %964 = vmatprep.subr.mxu0 0.0
    %965 = vmatpush1.msra.mxu0 0.0
    %966 = vmatprep.subr.mxu0 0.0
    %967 = vmatpush1.msra.mxu0 0.0
    %968 = vmatprep.subr.mxu0 0.0
    %969 = vmatpush1.msra.mxu0 0.0
    %970 = vmatprep.subr.mxu0 0.0
    %971 = vmatpush1.msra.mxu0 0.0
    %972 = vmatprep.subr.mxu0 0.0
    %973 = vmatpush1.msra.mxu0 0.0
    %974 = vmatprep.mubr.f32.mxu0 0.0
    %975 = vmatmul.mubr.f32.gmra.mrb[0].mxu0 %v774
    %v976 = vpop.f32.mrb[0].mxu0
    %v977 = vadd.f32 %v892, %v976
    %v978 = vpop.f32.mrb[0].mxu0
    %979 = vmatprep.mubr.f32.mxu0 0.0
    %980 = vmatmul.mubr.f32.gmra.mrb[0].mxu0 %v779
    %v981 = vpop.f32.mrb[0].mxu0
    %v982 = vadd.f32 %v897, %v981
    %v983 = vpop.f32.mrb[0].mxu0
    %984 = vmatprep.mubr.f32.mxu0 0.0
    %985 = vmatmul.mubr.f32.gmra.mrb[0].mxu0 %v784
    %v986 = vpop.f32.mrb[0].mxu0
    %v987 = vadd.f32 %v902, %v986
    %v988 = vpop.f32.mrb[0].mxu0
    %989 = vmatprep.mubr.f32.mxu0 0.0
    %990 = vmatmul.mubr.f32.gmra.mrb[0].mxu0 %v789
    %v991 = vpop.f32.mrb[0].mxu0
    %v992 = vadd.f32 %v907, %v991
    %v993 = vpop.f32.mrb[0].mxu0
    %994 = vdwg.mxu0
    %995 = vmatprep.subr.mxu0 0.0
    %996 = vmatpush1.msra.mxu0 %v703
    %997 = vmatprep.subr.mxu0 0.0
    %998 = vmatpush1.msra.mxu0 %v704
    %999 = vmatprep.subr.mxu0 0.0
    %1000 = vmatpush1.msra.mxu0 %v705
    %1001 = vmatprep.subr.mxu0 0.0
    %1002 = vmatpush1.msra.mxu0 %v706
    %1003 = vmatprep.subr.mxu0 0.0
    %1004 = vmatpush1.msra.mxu0 0.0
    %1005 = vmatprep.subr.mxu0 0.0
    %1006 = vmatpush1.msra.mxu0 0.0
    %1007 = vmatprep.subr.mxu0 0.0
    %1008 = vmatpush1.msra.mxu0 0.0
    %1009 = vmatprep.subr.mxu0 0.0
    %1010 = vmatpush1.msra.mxu0 0.0
    %1011 = vmatprep.subr.mxu0 0.0
    %1012 = vmatpush1.msra.mxu0 0.0
    %1013 = vmatprep.subr.mxu0 0.0
    %1014 = vmatpush1.msra.mxu0 0.0
    %1015 = vmatprep.subr.mxu0 0.0
    %1016 = vmatpush1.msra.mxu0 0.0
    %1017 = vmatprep.subr.mxu0 0.0
    %1018 = vmatpush1.msra.mxu0 0.0
    %1019 = vmatprep.subr.mxu0 0.0
    %1020 = vmatpush1.msra.mxu0 0.0
    %1021 = vmatprep.subr.mxu0 0.0
    %1022 = vmatpush1.msra.mxu0 0.0
    %1023 = vmatprep.subr.mxu0 0.0
    %1024 = vmatpush1.msra.mxu0 0.0
    %1025 = vmatprep.subr.mxu0 0.0
    %1026 = vmatpush1.msra.mxu0 0.0
    %1027 = vmatprep.subr.mxu0 0.0
    %1028 = vmatpush1.msra.mxu0 0.0
    %1029 = vmatprep.subr.mxu0 0.0
    %1030 = vmatpush1.msra.mxu0 0.0
    %1031 = vmatprep.subr.mxu0 0.0
    %1032 = vmatpush1.msra.mxu0 0.0
    %1033 = vmatprep.subr.mxu0 0.0
    %1034 = vmatpush1.msra.mxu0 0.0
    %1035 = vmatprep.subr.mxu0 0.0
    %1036 = vmatpush1.msra.mxu0 0.0
    %1037 = vmatprep.subr.mxu0 0.0
    %1038 = vmatpush1.msra.mxu0 0.0
    %1039 = vmatprep.subr.mxu0 0.0
    %1040 = vmatpush1.msra.mxu0 0.0
    %1041 = vmatprep.subr.mxu0 0.0
    %1042 = vmatpush1.msra.mxu0 0.0
    %1043 = vmatprep.subr.mxu0 0.0
    %1044 = vmatpush1.msra.mxu0 0.0
    %1045 = vmatprep.subr.mxu0 0.0
    %1046 = vmatpush1.msra.mxu0 0.0
    %1047 = vmatprep.subr.mxu0 0.0
    %1048 = vmatpush1.msra.mxu0 0.0
    %1049 = vmatprep.subr.mxu0 0.0
    %1050 = vmatpush1.msra.mxu0 0.0
    %1051 = vmatprep.subr.mxu0 0.0
    %1052 = vmatpush1.msra.mxu0 0.0
    %1053 = vmatprep.subr.mxu0 0.0
    %1054 = vmatpush1.msra.mxu0 0.0
    %1055 = vmatprep.subr.mxu0 0.0
    %1056 = vmatpush1.msra.mxu0 0.0
    %1057 = vmatprep.subr.mxu0 0.0
    %1058 = vmatpush1.msra.mxu0 0.0
    %1059 = vmatprep.mubr.f32.mxu0 0.0
    %1060 = vmatmul.mubr.f32.gmra.mrb[0].mxu0 %v466
    %v1061 = vpop.f32.mrb[0].mxu0
    %v1062 = vadd.f32 0.0, %v1061
    %v1063 = vpop.f32.mrb[0].mxu0
    %1064 = vmatprep.mubr.f32.mxu0 0.0
    %1065 = vmatmul.mubr.f32.gmra.mrb[0].mxu0 %v469
    %v1066 = vpop.f32.mrb[0].mxu0
    %v1067 = vadd.f32 0.0, %v1066
    %v1068 = vpop.f32.mrb[0].mxu0
    %1069 = vmatprep.mubr.f32.mxu0 0.0
    %1070 = vmatmul.mubr.f32.gmra.mrb[0].mxu0 %v472
    %v1071 = vpop.f32.mrb[0].mxu0
    %v1072 = vadd.f32 0.0, %v1071
    %v1073 = vpop.f32.mrb[0].mxu0
    %1074 = vmatprep.mubr.f32.mxu0 0.0
    %1075 = vmatmul.mubr.f32.gmra.mrb[0].mxu0 %v475
    %v1076 = vpop.f32.mrb[0].mxu0
    %v1077 = vadd.f32 0.0, %v1076
    %v1078 = vpop.f32.mrb[0].mxu0
    %1079 = vdwg.mxu0
    %s1080 = scalar_lea.vmem [#allocation11], 256
    %v1081 = vld [vmem:[%s1080] sm:$0xff]
    %v1082 = vld [vmem:[%s1080 + $0x8] sm:$0xff]
    %v1083 = vld [vmem:[%s1080 + $0x10] sm:$0xff]
    %v1084 = vld [vmem:[%s1080 + $0x18] sm:$0xff]
    %v1085 = vld [vmem:[%s1080 + $0x20] sm:$0xff]
    %v1086 = vld [vmem:[%s1080 + $0x28] sm:$0xff]
    %v1087 = vld [vmem:[%s1080 + $0x30] sm:$0xff]
    %v1088 = vld [vmem:[%s1080 + $0x38] sm:$0xff]
    %v1089 = vld [vmem:[%s1080 + $0x40] sm:$0xff]
    %v1090 = vld [vmem:[%s1080 + $0x48] sm:$0xff]
    %v1091 = vld [vmem:[%s1080 + $0x50] sm:$0xff]
    %v1092 = vld [vmem:[%s1080 + $0x58] sm:$0xff]
    %v1093 = vld [vmem:[%s1080 + $0x60] sm:$0xff]
    %v1094 = vld [vmem:[%s1080 + $0x68] sm:$0xff]
    %v1095 = vld [vmem:[%s1080 + $0x70] sm:$0xff]
    %v1096 = vld [vmem:[%s1080 + $0x78] sm:$0xff]
    %1097 = vmatprep.subr.mxu0 0.0
    %1098 = vmatpush1.msra.mxu0 %v1081
    %1099 = vmatprep.subr.mxu0 0.0
    %1100 = vmatpush1.msra.mxu0 %v1082
    %1101 = vmatprep.subr.mxu0 0.0
    %1102 = vmatpush1.msra.mxu0 %v1083
    %1103 = vmatprep.subr.mxu0 0.0
    %1104 = vmatpush1.msra.mxu0 %v1084
    %1105 = vmatprep.subr.mxu0 0.0
    %1106 = vmatpush1.msra.mxu0 %v1085
    %1107 = vmatprep.subr.mxu0 0.0
    %1108 = vmatpush1.msra.mxu0 %v1086
    %1109 = vmatprep.subr.mxu0 0.0
    %1110 = vmatpush1.msra.mxu0 %v1087
    %1111 = vmatprep.subr.mxu0 0.0
    %1112 = vmatpush1.msra.mxu0 %v1088
    %1113 = vmatprep.subr.mxu0 0.0
    %1114 = vmatpush1.msra.mxu0 %v1089
    %1115 = vmatprep.subr.mxu0 0.0
    %1116 = vmatpush1.msra.mxu0 %v1090
    %1117 = vmatprep.subr.mxu0 0.0
    %1118 = vmatpush1.msra.mxu0 %v1091
    %1119 = vmatprep.subr.mxu0 0.0
    %1120 = vmatpush1.msra.mxu0 %v1092
    %1121 = vmatprep.subr.mxu0 0.0
    %1122 = vmatpush1.msra.mxu0 %v1093
    %1123 = vmatprep.subr.mxu0 0.0
    %1124 = vmatpush1.msra.mxu0 %v1094
    %1125 = vmatprep.subr.mxu0 0.0
    %1126 = vmatpush1.msra.mxu0 %v1095
    %1127 = vmatprep.subr.mxu0 0.0
    %1128 = vmatpush1.msra.mxu0 %v1096
    %1129 = vmatprep.subr.mxu0 0.0
    %1130 = vmatpush1.msra.mxu0 0.0
    %1131 = vmatprep.subr.mxu0 0.0
    %1132 = vmatpush1.msra.mxu0 0.0
    %1133 = vmatprep.subr.mxu0 0.0
    %1134 = vmatpush1.msra.mxu0 0.0
    %1135 = vmatprep.subr.mxu0 0.0
    %1136 = vmatpush1.msra.mxu0 0.0
    %1137 = vmatprep.subr.mxu0 0.0
    %1138 = vmatpush1.msra.mxu0 0.0
    %1139 = vmatprep.subr.mxu0 0.0
    %1140 = vmatpush1.msra.mxu0 0.0
    %1141 = vmatprep.subr.mxu0 0.0
    %1142 = vmatpush1.msra.mxu0 0.0
    %1143 = vmatprep.subr.mxu0 0.0
    %1144 = vmatpush1.msra.mxu0 0.0
    %1145 = vmatprep.subr.mxu0 0.0
    %1146 = vmatpush1.msra.mxu0 0.0
    %1147 = vmatprep.subr.mxu0 0.0
    %1148 = vmatpush1.msra.mxu0 0.0
    %1149 = vmatprep.subr.mxu0 0.0
    %1150 = vmatpush1.msra.mxu0 0.0
    %1151 = vmatprep.subr.mxu0 0.0
    %1152 = vmatpush1.msra.mxu0 0.0
    %1153 = vmatprep.subr.mxu0 0.0
    %1154 = vmatpush1.msra.mxu0 0.0
    %1155 = vmatprep.subr.mxu0 0.0
    %1156 = vmatpush1.msra.mxu0 0.0
    %1157 = vmatprep.subr.mxu0 0.0
    %1158 = vmatpush1.msra.mxu0 0.0
    %1159 = vmatprep.subr.mxu0 0.0
    %1160 = vmatpush1.msra.mxu0 0.0
    %1161 = vmatprep.mubr.f32.mxu0 0.0
    %1162 = vmatmul.mubr.f32.gmra.mrb[0].mxu0 %v1062
    %v1163 = vpop.f32.mrb[0].mxu0
    %v1164 = vadd.f32 0.0, %v1163
    %v1165 = vpop.f32.mrb[0].mxu0
    %1166 = vmatprep.mubr.f32.mxu0 0.0
    %1167 = vmatmul.mubr.f32.gmra.mrb[0].mxu0 %v1067
    %v1168 = vpop.f32.mrb[0].mxu0
    %v1169 = vadd.f32 0.0, %v1168
    %v1170 = vpop.f32.mrb[0].mxu0
    %1171 = vmatprep.mubr.f32.mxu0 0.0
    %1172 = vmatmul.mubr.f32.gmra.mrb[0].mxu0 %v1072
    %v1173 = vpop.f32.mrb[0].mxu0
    %v1174 = vadd.f32 0.0, %v1173
    %v1175 = vpop.f32.mrb[0].mxu0
    %1176 = vmatprep.mubr.f32.mxu0 0.0
    %1177 = vmatmul.mubr.f32.gmra.mrb[0].mxu0 %v1077
    %v1178 = vpop.f32.mrb[0].mxu0
    %v1179 = vadd.f32 0.0, %v1178
    %v1180 = vpop.f32.mrb[0].mxu0
    %1181 = vdwg.mxu0
    %v1182 = vadd.f32 %v977, %v1164
    %v1183 = vadd.f32 %v982, %v1169
    %v1184 = vadd.f32 %v987, %v1174
    %v1185 = vadd.f32 %v992, %v1179
    %v1186 = vld [vmem:[#allocation13] sm:$0xff]
    %v1187 = vld [vmem:[#allocation13 + $0x8] sm:$0xff]
    %v1188 = vld [vmem:[#allocation13 + $0x10] sm:$0xff]
    %v1189 = vld [vmem:[#allocation13 + $0x18] sm:$0xff]
    %1190 = vmatprep.subr.mxu0 0.0
    %1191 = vmatpush1.msra.mxu0 %v1186
    %1192 = vmatprep.subr.mxu0 0.0
    %1193 = vmatpush1.msra.mxu0 %v1187
    %1194 = vmatprep.subr.mxu0 0.0
    %1195 = vmatpush1.msra.mxu0 %v1188
    %1196 = vmatprep.subr.mxu0 0.0
    %1197 = vmatpush1.msra.mxu0 %v1189
    %1198 = vmatprep.subr.mxu0 0.0
    %1199 = vmatpush1.msra.mxu0 0.0
    %1200 = vmatprep.subr.mxu0 0.0
    %1201 = vmatpush1.msra.mxu0 0.0
    %1202 = vmatprep.subr.mxu0 0.0
    %1203 = vmatpush1.msra.mxu0 0.0
    %1204 = vmatprep.subr.mxu0 0.0
    %1205 = vmatpush1.msra.mxu0 0.0
    %1206 = vmatprep.subr.mxu0 0.0
    %1207 = vmatpush1.msra.mxu0 0.0
    %1208 = vmatprep.subr.mxu0 0.0
    %1209 = vmatpush1.msra.mxu0 0.0
    %1210 = vmatprep.subr.mxu0 0.0
    %1211 = vmatpush1.msra.mxu0 0.0
    %1212 = vmatprep.subr.mxu0 0.0
    %1213 = vmatpush1.msra.mxu0 0.0
    %1214 = vmatprep.subr.mxu0 0.0
    %1215 = vmatpush1.msra.mxu0 0.0
    %1216 = vmatprep.subr.mxu0 0.0
    %1217 = vmatpush1.msra.mxu0 0.0
    %1218 = vmatprep.subr.mxu0 0.0
    %1219 = vmatpush1.msra.mxu0 0.0
    %1220 = vmatprep.subr.mxu0 0.0
    %1221 = vmatpush1.msra.mxu0 0.0
    %1222 = vmatprep.subr.mxu0 0.0
    %1223 = vmatpush1.msra.mxu0 0.0
    %1224 = vmatprep.subr.mxu0 0.0
    %1225 = vmatpush1.msra.mxu0 0.0
    %1226 = vmatprep.subr.mxu0 0.0
    %1227 = vmatpush1.msra.mxu0 0.0
    %1228 = vmatprep.subr.mxu0 0.0
    %1229 = vmatpush1.msra.mxu0 0.0
    %1230 = vmatprep.subr.mxu0 0.0
    %1231 = vmatpush1.msra.mxu0 0.0
    %1232 = vmatprep.subr.mxu0 0.0
    %1233 = vmatpush1.msra.mxu0 0.0
    %1234 = vmatprep.subr.mxu0 0.0
    %1235 = vmatpush1.msra.mxu0 0.0
    %1236 = vmatprep.subr.mxu0 0.0
    %1237 = vmatpush1.msra.mxu0 0.0
    %1238 = vmatprep.subr.mxu0 0.0
    %1239 = vmatpush1.msra.mxu0 0.0
    %1240 = vmatprep.subr.mxu0 0.0
    %1241 = vmatpush1.msra.mxu0 0.0
    %1242 = vmatprep.subr.mxu0 0.0
    %1243 = vmatpush1.msra.mxu0 0.0
    %1244 = vmatprep.subr.mxu0 0.0
    %1245 = vmatpush1.msra.mxu0 0.0
    %1246 = vmatprep.subr.mxu0 0.0
    %1247 = vmatpush1.msra.mxu0 0.0
    %1248 = vmatprep.subr.mxu0 0.0
    %1249 = vmatpush1.msra.mxu0 0.0
    %1250 = vmatprep.subr.mxu0 0.0
    %1251 = vmatpush1.msra.mxu0 0.0
    %1252 = vmatprep.subr.mxu0 0.0
    %1253 = vmatpush1.msra.mxu0 0.0
    %1254 = vmatprep.mubr.f32.mxu0 0.0
    %1255 = vmatmul.mubr.f32.gmra.mrb[0].mxu0 %v272
    %v1256 = vpop.f32.mrb[0].mxu0
    %v1257 = vadd.f32 0.0, %v1256
    %v1258 = vpop.f32.mrb[0].mxu0
    %1259 = vmatprep.mubr.f32.mxu0 0.0
    %1260 = vmatmul.mubr.f32.gmra.mrb[0].mxu0 %v275
    %v1261 = vpop.f32.mrb[0].mxu0
    %v1262 = vadd.f32 0.0, %v1261
    %v1263 = vpop.f32.mrb[0].mxu0
    %1264 = vmatprep.mubr.f32.mxu0 0.0
    %1265 = vmatmul.mubr.f32.gmra.mrb[0].mxu0 %v278
    %v1266 = vpop.f32.mrb[0].mxu0
    %v1267 = vadd.f32 0.0, %v1266
    %v1268 = vpop.f32.mrb[0].mxu0
    %1269 = vmatprep.mubr.f32.mxu0 0.0
    %1270 = vmatmul.mubr.f32.gmra.mrb[0].mxu0 %v281
    %v1271 = vpop.f32.mrb[0].mxu0
    %v1272 = vadd.f32 0.0, %v1271
    %v1273 = vpop.f32.mrb[0].mxu0
    %1274 = vdwg.mxu0
    %v1275 = vld [vmem:[#allocation14] sm:$0xff]
    %v1276 = vld [vmem:[#allocation14 + $0x8] sm:$0xff]
    %v1277 = vld [vmem:[#allocation14 + $0x10] sm:$0xff]
    %v1278 = vld [vmem:[#allocation14 + $0x18] sm:$0xff]
    %v1280 = vsel %vm164, %v152, 0
    %v1283 = vsel %vm164, %v153, 0
    %v1286 = vsel %vm164, %v154, 0
    %v1289 = vsel %vm164, %v155, 0
    %1291 = vmatprep.subr.mxu0 0.0
    %1292 = vmatpush1.msra.mxu0 %v1275
    %1293 = vmatprep.subr.mxu0 0.0
    %1294 = vmatpush1.msra.mxu0 %v1276
    %1295 = vmatprep.subr.mxu0 0.0
    %1296 = vmatpush1.msra.mxu0 %v1277
    %1297 = vmatprep.subr.mxu0 0.0
    %1298 = vmatpush1.msra.mxu0 %v1278
    %1299 = vmatprep.subr.mxu0 0.0
    %1300 = vmatpush1.msra.mxu0 0.0
    %1301 = vmatprep.subr.mxu0 0.0
    %1302 = vmatpush1.msra.mxu0 0.0
    %1303 = vmatprep.subr.mxu0 0.0
    %1304 = vmatpush1.msra.mxu0 0.0
    %1305 = vmatprep.subr.mxu0 0.0
    %1306 = vmatpush1.msra.mxu0 0.0
    %1307 = vmatprep.subr.mxu0 0.0
    %1308 = vmatpush1.msra.mxu0 0.0
    %1309 = vmatprep.subr.mxu0 0.0
    %1310 = vmatpush1.msra.mxu0 0.0
    %1311 = vmatprep.subr.mxu0 0.0
    %1312 = vmatpush1.msra.mxu0 0.0
    %1313 = vmatprep.subr.mxu0 0.0
    %1314 = vmatpush1.msra.mxu0 0.0
    %1315 = vmatprep.subr.mxu0 0.0
    %1316 = vmatpush1.msra.mxu0 0.0
    %1317 = vmatprep.subr.mxu0 0.0
    %1318 = vmatpush1.msra.mxu0 0.0
    %1319 = vmatprep.subr.mxu0 0.0
    %1320 = vmatpush1.msra.mxu0 0.0
    %1321 = vmatprep.subr.mxu0 0.0
    %1322 = vmatpush1.msra.mxu0 0.0
    %1323 = vmatprep.subr.mxu0 0.0
    %1324 = vmatpush1.msra.mxu0 0.0
    %1325 = vmatprep.subr.mxu0 0.0
    %1326 = vmatpush1.msra.mxu0 0.0
    %1327 = vmatprep.subr.mxu0 0.0
    %1328 = vmatpush1.msra.mxu0 0.0
    %1329 = vmatprep.subr.mxu0 0.0
    %1330 = vmatpush1.msra.mxu0 0.0
    %1331 = vmatprep.subr.mxu0 0.0
    %1332 = vmatpush1.msra.mxu0 0.0
    %1333 = vmatprep.subr.mxu0 0.0
    %1334 = vmatpush1.msra.mxu0 0.0
    %1335 = vmatprep.subr.mxu0 0.0
    %1336 = vmatpush1.msra.mxu0 0.0
    %1337 = vmatprep.subr.mxu0 0.0
    %1338 = vmatpush1.msra.mxu0 0.0
    %1339 = vmatprep.subr.mxu0 0.0
    %1340 = vmatpush1.msra.mxu0 0.0
    %1341 = vmatprep.subr.mxu0 0.0
    %1342 = vmatpush1.msra.mxu0 0.0
    %1343 = vmatprep.subr.mxu0 0.0
    %1344 = vmatpush1.msra.mxu0 0.0
    %1345 = vmatprep.subr.mxu0 0.0
    %1346 = vmatpush1.msra.mxu0 0.0
    %1347 = vmatprep.subr.mxu0 0.0
    %1348 = vmatpush1.msra.mxu0 0.0
    %1349 = vmatprep.subr.mxu0 0.0
    %1350 = vmatpush1.msra.mxu0 0.0
    %1351 = vmatprep.subr.mxu0 0.0
    %1352 = vmatpush1.msra.mxu0 0.0
    %1353 = vmatprep.subr.mxu0 0.0
    %1354 = vmatpush1.msra.mxu0 0.0
    %1355 = vmatprep.mubr.f32.mxu0 0.0
    %1356 = vmatmul.mubr.f32.gmra.mrb[0].mxu0 %v1280
    %v1357 = vpop.f32.mrb[0].mxu0
    %v1358 = vadd.f32 0.0, %v1357
    %v1359 = vpop.f32.mrb[0].mxu0
    %1360 = vmatprep.mubr.f32.mxu0 0.0
    %1361 = vmatmul.mubr.f32.gmra.mrb[0].mxu0 %v1283
    %v1362 = vpop.f32.mrb[0].mxu0
    %v1363 = vadd.f32 0.0, %v1362
    %v1364 = vpop.f32.mrb[0].mxu0
    %1365 = vmatprep.mubr.f32.mxu0 0.0
    %1366 = vmatmul.mubr.f32.gmra.mrb[0].mxu0 %v1286
    %v1367 = vpop.f32.mrb[0].mxu0
    %v1368 = vadd.f32 0.0, %v1367
    %v1369 = vpop.f32.mrb[0].mxu0
    %1370 = vmatprep.mubr.f32.mxu0 0.0
    %1371 = vmatmul.mubr.f32.gmra.mrb[0].mxu0 %v1289
    %v1372 = vpop.f32.mrb[0].mxu0
    %v1373 = vadd.f32 0.0, %v1372
    %v1374 = vpop.f32.mrb[0].mxu0
    %1375 = vdwg.mxu0
    %v1376 = vadd.f32 %v1182, %v1257
    %v1377 = vadd.f32 %v1183, %v1262
    %v1378 = vadd.f32 %v1184, %v1267
    %v1379 = vadd.f32 %v1185, %v1272
    %v1380 = vld [vmem:[%s9] sm:$0x1]
    %v1382 = vlaneseq
    %v1383 = vshrl.u32 %v1382, 7
    %v1384 = vsub.s32 0, %v1383
    %v1385 = vrot.slane %v1380, %v1384
    %v1387 = vadd.f32 %v1376, %v1385
    %v1388 = vadd.f32 %v1377, %v1385
    %v1389 = vadd.f32 %v1378, %v1385
    %v1390 = vadd.f32 %v1379, %v1385
    %v1391 = vsub.f32 0.0, %v1387
    %v1392 = vsub.f32 0.0, %v1388
    %v1393 = vsub.f32 0.0, %v1389
    %v1394 = vsub.f32 0.0, %v1390
    %v1395 = vmul.f32 %v1391, 1.442695
    %v1396 = vpow.pop %v1395
    %v1397 = vmul.f32 %v1392, 1.442695
    %v1398 = vpow.pop %v1397
    %v1399 = vmul.f32 %v1393, 1.442695
    %v1400 = vpow.pop %v1399
    %v1401 = vmul.f32 %v1394, 1.442695
    %v1402 = vpow.pop %v1401
    %v1403 = vadd.f32 %v1396, 1.0
    %v1404 = vadd.f32 %v1398, 1.0
    %v1405 = vadd.f32 %v1400, 1.0
    %v1406 = vadd.f32 %v1402, 1.0
    %v1407 = vrcp.pop %v1403
    %v1408 = vmul.f32 1.0, %v1407
    %v1409 = vrcp.pop %v1404
    %v1410 = vmul.f32 1.0, %v1409
    %v1411 = vrcp.pop %v1405
    %v1412 = vmul.f32 1.0, %v1411
    %v1413 = vrcp.pop %v1406
    %v1414 = vmul.f32 1.0, %v1413
    %v1415 = vmul.f32 %v1387, %v1408
    %v1416 = vmul.f32 %v1388, %v1410
    %v1417 = vmul.f32 %v1389, %v1412
    %v1418 = vmul.f32 %v1390, %v1414
    %v1419 = vadd.f32 %v1415, %v1358
    %v1420 = vadd.f32 %v1416, %v1363
    %v1421 = vadd.f32 %v1417, %v1368
    %v1422 = vadd.f32 %v1418, %v1373
    %v1423 = vld [vmem:[%s10] sm:$0x1]
    %v1425 = vlaneseq
    %v1426 = vshrl.u32 %v1425, 7
    %v1427 = vsub.s32 0, %v1426
    %v1428 = vrot.slane %v1423, %v1427
    %v1430 = vadd.f32 %v1419, %v1428
    %v1431 = vadd.f32 %v1420, %v1428
    %v1432 = vadd.f32 %v1421, %v1428
    %v1433 = vadd.f32 %v1422, %v1428
    %1434 = vst [vmem:[#allocation16] sm:$0xff] %v1430
    %1435 = vst [vmem:[#allocation16 + $0x8] sm:$0xff] %v1431
    %1436 = vst [vmem:[#allocation16 + $0x10] sm:$0xff] %v1432
    %1437 = vst [vmem:[#allocation16 + $0x18] sm:$0xff] %v1433
    // Predicated region
    $region78: #{tpu_custom_call.1} parent=1 // pred_check
      _
    $region79: #{tpu_custom_call.1} parent=1 // pred_check_branch
      %1439 = sbr.rel (0) target = $region81
    $region80: #{tpu_custom_call.1} parent=1 // pred_region
      %s1441 = ssub.s32 512, 512
      %1442 = vsyncadd [#allocation4], %s1441
      %s1443 = sshll.u32 [#allocation16], 4
      %s1444 = int_to_ptr.vmem [resolvable:$true] %s1443
      %1449 = dma.vmem_to_hbm [thread:$0]  %s1444, 512, %s11, [#allocation4], 128, 128, 8
    $region81: #{tpu_custom_call.1} parent=1 // pred_fallthru
      _
    // Predicated region
    $region82: #{tpu_custom_call.1} parent=1 // pred_check
      _
    $region83: #{tpu_custom_call.1} parent=1 // pred_check_branch
      %1451 = sbr.rel (0) target = $region85
    $region84: #{tpu_custom_call.1} parent=1 // pred_region
      %1452 = dma.done [#allocation4], 512
    $region85: #{tpu_custom_call.1} parent=1 // pred_fallthru
      _
    %1453 = vsyncpa [#allocation3], 1
    %1454 = vsyncpa [#allocation6], 1
    %1455 = vsyncpa [#allocation9], 1
    %1456 = vsyncpa [#allocation12], 1
    %1457 = vsyncpa [#allocation15], 1
    %1458 = vsyncpa [#allocation4], 1

</llo_original>
